<compile_context>
chip_gen: v6e
topology: v6e:2x2x1
jax: 0.10.0
libtpu: 0.0.40
codegen_flags: <defaults>
</compile_context>

<pallas_src>
import math
from functools import partial

import jax
import jax.numpy as jnp
from jax.experimental import pallas as pl
from jax.experimental.pallas import tpu as pltpu


# ---------------------------------------------------------------------------
# Kernels
# ---------------------------------------------------------------------------
# Grid = (row blocks of output nodes, K blocks of the adjacency contraction).
# The f32 accumulator lives in VMEM scratch; init at k==0, finalize at last k.

def layer1_kernel(adj_ref, s1b_ref, s1f_ref, d_ref, b1_ref, eps1_ref, w2_ref,
                  s2_ref, acc_ref):
    k = pl.program_id(1)

    @pl.when(k == 0)
    def _():
        acc_ref[...] = jnp.zeros_like(acc_ref)

    # Aggregate: adj block [TM, TK] @ support1 block [TK, Hp] on the MXU (bf16, f32 acc).
    acc_ref[...] += jnp.dot(adj_ref[...], s1b_ref[...],
                            preferred_element_type=jnp.float32)

    @pl.when(k == pl.num_programs(1) - 1)
    def _():
        # eps rescale of adj's diagonal as a small f32 correction (no NxN temporaries):
        #   adj' @ s = adj @ s + (eps - 1) * diag(adj)[:, None] * s
        corr = (eps1_ref[0] - 1.0) * d_ref[...] * s1f_ref[...]
        h = jnp.maximum(acc_ref[...] + corr + b1_ref[...], 0.0)   # ReLU; dropout = identity
        # support2 = h @ W2 for this row block (lane-dense padded width).
        s2_ref[...] = jnp.dot(h.astype(jnp.bfloat16), w2_ref[...],
                              preferred_element_type=jnp.float32)


def layer2_kernel(nclass, adj_ref, s2b_ref, s2f_ref, d_ref, b2_ref, eps2_ref,
                  out_ref, acc_ref):
    k = pl.program_id(1)

    @pl.when(k == 0)
    def _():
        acc_ref[...] = jnp.zeros_like(acc_ref)

    acc_ref[...] += jnp.dot(adj_ref[...], s2b_ref[...],
                            preferred_element_type=jnp.float32)

    @pl.when(k == pl.num_programs(1) - 1)
    def _():
        logits = (acc_ref[...]
                  + (eps2_ref[0] - 1.0) * d_ref[...] * s2f_ref[...]
                  + b2_ref[...])
        # Mask the lane-padding columns so log_softmax only sees real classes.
        col = jax.lax.broadcasted_iota(jnp.int32, logits.shape, 1)
        logits = jnp.where(col < nclass, logits, jnp.float32(-1e30))
        m = jnp.max(logits, axis=-1, keepdims=True)
        z = logits - m
        lse = jnp.log(jnp.sum(jnp.exp(z), axis=-1, keepdims=True))
        out_ref[...] = z - lse


# ---------------------------------------------------------------------------
# Wrapper
# ---------------------------------------------------------------------------

def _round_up(v, m):
    return ((v + m - 1) // m) * m


def _vmem_budget_bytes():
    # Generation-aware budget: ~3/4 of physical VMEM, capped.
    # v5e/v6e (128 MiB) -> 96 MiB; v7x (64 MiB) -> 48 MiB.
    try:
        cap = int(pltpu.get_tpu_info().vmem_capacity_bytes)
    except Exception:
        cap = 64 * 1024 * 1024
    return int(min((cap * 3) // 4, 96 * 1024 * 1024))


def gnn_forward(x, adj, w1, b1, eps1, w2, b2, eps2, *, block_rows=128):
    n, nfeat = x.shape
    nhid = w1.shape[1]
    nclass = w2.shape[1]

    f32, bf16 = jnp.float32, jnp.bfloat16
    tm = block_rows            # output-row tile (use 256-512 for large N on v6e)
    tk = block_rows            # contraction tile of the adjacency
    n_p = _round_up(n, max(tm, tk))
    h_p = _round_up(max(nhid, 1), 128)   # lane-dense hidden width
    c_p = _round_up(max(nclass, 1), 128) # lane-dense class width

    def pad2(a, r, c):
        return jnp.pad(a, ((0, r - a.shape[0]), (0, c - a.shape[1])))

    # support1 = x @ W1 : tiny dense matmul, let XLA handle it (no kernel launch).
    s1 = jnp.dot(x.astype(f32), w1.astype(f32))

    # Padded / pre-cast operands (casts hoisted out of the kernels).
    adj_p = pad2(adj.astype(f32), n_p, n_p)
    adj_bf = adj_p.astype(bf16)                       # MXU operand, streamed from HBM
    d = jnp.diagonal(adj_p).reshape(n_p, 1).astype(f32)

    s1_p = pad2(s1, n_p, h_p)                         # f32 (eps correction)
    s1_bf = s1_p.astype(bf16)                         # bf16 MXU operand, cast once

    w2_bf = pad2(w2.astype(f32), h_p, c_p).astype(bf16)
    b1_p = pad2(b1.astype(f32), 1, h_p)
    b2_p = pad2(b2.astype(f32), 1, c_p)

    grid = (n_p // tm, n_p // tk)

    smem_spec = pl.BlockSpec(memory_space=pltpu.MemorySpace.SMEM)
    adj_spec = pl.BlockSpec((tm, tk), lambda i, k: (i, k))

    def kblk(width):     # contraction block of the support operand
        return pl.BlockSpec((tk, width), lambda i, k: (k, 0))

    def rowblk(width):   # output-row-aligned block (resident across k)
        return pl.BlockSpec((tm, width), lambda i, k: (i, 0))

    def full(r, c):
        return pl.BlockSpec((r, c), lambda i, k: (0, 0))

    params = pltpu.CompilerParams(
        dimension_semantics=("parallel", "arbitrary"),
        vmem_limit_bytes=_vmem_budget_bytes(),
    )

    # ---- pass 1: support2 = relu(adj' @ support1 + b1) @ W2 ----------------
    s2 = pl.pallas_call(
        layer1_kernel,
        grid=grid,
        in_specs=[adj_spec,            # adj (tm, tk) bf16
                  kblk(h_p),           # support1 (tk, Hp) bf16
                  rowblk(h_p),         # support1 rows (tm, Hp) f32 for eps corr
                  rowblk(1),           # diag(adj) (tm, 1) f32
                  full(1, h_p),        # b1
                  smem_spec,           # eps1 scalar
                  full(h_p, c_p)],     # W2 bf16
        out_specs=rowblk(c_p),
        out_shape=jax.ShapeDtypeStruct((n_p, c_p), f32),
        scratch_shapes=[pltpu.VMEM((tm, h_p), f32)],
        compiler_params=params,
        cost_estimate=pl.CostEstimate(
            flops=2 * n_p * n_p * h_p + 2 * n_p * h_p * c_p,
            transcendentals=0,
            bytes_accessed=2 * n_p * n_p + 6 * n_p * h_p + 4 * n_p * c_p),
    )(adj_bf, s1_bf, s1_p, d, b1_p, eps1.astype(f32), w2_bf)

    s2_bf = s2.astype(bf16)   # single wrapper-side cast of the streamed MXU operand

    # ---- pass 2: out = log_softmax(adj' @ support2 + b2) -------------------
    out_p = pl.pallas_call(
        partial(layer2_kernel, nclass),
        grid=grid,
        in_specs=[adj_spec,            # adj (tm, tk) bf16
                  kblk(c_p),           # support2 (tk, Cp) bf16
                  rowblk(c_p),         # support2 rows (tm, Cp) f32 for eps corr
                  rowblk(1),           # diag(adj)
                  full(1, c_p),        # b2
                  smem_spec],          # eps2 scalar
        out_specs=rowblk(c_p),
        out_shape=jax.ShapeDtypeStruct((n_p, c_p), f32),
        scratch_shapes=[pltpu.VMEM((tm, c_p), f32)],
        compiler_params=params,
        cost_estimate=pl.CostEstimate(
            flops=2 * n_p * n_p * c_p + 8 * n_p * c_p,
            transcendentals=2 * n_p * c_p,
            bytes_accessed=2 * n_p * n_p + 6 * n_p * c_p + 4 * n_p * c_p),
    )(adj_bf, s2_bf, s2, d, b2_p, eps2.astype(f32))

    return out_p[:n, :nclass]


def gnn_reference(x, adj, w1, b1, eps1, w2, b2, eps2):
    """Pure-JAX f32 reference of the PyTorch forward (eval mode)."""
    n = adj.shape[0]
    eye = jnp.eye(n, dtype=adj.dtype)

    def gcn(h, eps, w, b):
        a = eye * (eps[0] * adj) + (1.0 - eye) * adj
        return a @ (h @ w) + b

    h = jax.nn.relu(gcn(x, eps1, w1, b1))
    logits = gcn(h, eps2, w2, b2)
    return jax.nn.log_softmax(logits, axis=-1)


if __name__ == "__main__":
    # Small, Cora-like shapes; N deliberately NOT a multiple of the row block so
    # the ragged-N padding path and the K-tiled accumulation are both exercised.
    N, NFEAT, NHID, NCLASS = 300, 64, 32, 8

    key = jax.random.PRNGKey(0)
    kx, kadj, kw1, kb1, kw2, kb2 = jax.random.split(key, 6)

    x = jax.random.normal(kx, (N, NFEAT), dtype=jnp.float32)

    # Symmetric row-normalized-ish adjacency with self-loops.
    a = (jax.random.uniform(kadj, (N, N)) < 0.05).astype(jnp.float32)
    a = jnp.maximum(a, a.T) + jnp.eye(N, dtype=jnp.float32)
    adj = a / jnp.sum(a, axis=-1, keepdims=True)

    # Parameter init mirroring Graphsn_GCN.reset_parameters:
    # weight/bias ~ U(-1/sqrt(out), 1/sqrt(out)); eps constant.
    stdv1 = 1.0 / math.sqrt(NHID)
    stdv2 = 1.0 / math.sqrt(NCLASS)
    w1 = jax.random.uniform(kw1, (NFEAT, NHID), jnp.float32, -stdv1, stdv1)
    b1 = jax.random.uniform(kb1, (1, NHID), jnp.float32, -stdv1, stdv1)
    w2 = jax.random.uniform(kw2, (NHID, NCLASS), jnp.float32, -stdv2, stdv2)
    b2 = jax.random.uniform(kb2, (1, NCLASS), jnp.float32, -stdv2, stdv2)
    eps1 = jnp.array([0.21], dtype=jnp.float32)
    eps2 = jnp.array([0.21], dtype=jnp.float32)

    fwd = jax.jit(gnn_forward)
    out = fwd(x, adj, w1, b1, eps1, w2, b2, eps2)
    out = jax.block_until_ready(out)

    ref = gnn_reference(x, adj, w1, b1, eps1, w2, b2, eps2)
    assert out.shape == (N, NCLASS)
    # bf16 MXU operands with f32 accumulation -> slightly loosened tolerance.
    assert jnp.allclose(out, ref, atol=3e-2, rtol=3e-2), "mismatch vs reference"

    print("KERNEL_OK")
</pallas_src>

<mosaic_0001>
module attributes {stable_mosaic.version = 11 : i64} {
  func.func @layer1_kernel(%arg0: i32, %arg1: i32, %arg2: memref<128x128xbf16, #tpu.memory_space<vmem>>, %arg3: memref<128x128xbf16, #tpu.memory_space<vmem>>, %arg4: memref<128x128xf32, #tpu.memory_space<vmem>>, %arg5: memref<128x1xf32, #tpu.memory_space<vmem>>, %arg6: memref<1x128xf32, #tpu.memory_space<vmem>>, %arg7: memref<1xf32, #tpu.memory_space<smem>>, %arg8: memref<128x128xbf16, #tpu.memory_space<vmem>>, %arg9: memref<128x128xf32, #tpu.memory_space<vmem>>, %arg10: memref<128x128xf32, #tpu.memory_space<vmem>>) attributes {dimension_semantics = [#tpu.dimension_semantics<parallel>, #tpu.dimension_semantics<arbitrary>], iteration_bounds = array<i64: 3, 3>, scalar_prefetch = 0 : i64, scratch_operands = 1 : i64, tpu.core_type = #tpu.core_type<tc>, window_params = [{transform_indices = @transform_0, window_bounds = array<i64: 128, 128>}, {transform_indices = @transform_1, window_bounds = array<i64: 128, 128>}, {transform_indices = @transform_2, window_bounds = array<i64: 128, 128>}, {transform_indices = @transform_3, window_bounds = array<i64: 128, 1>}, {pipeline_mode = #tpu.pipeline_mode<synchronous>, transform_indices = @transform_4, window_bounds = array<i64: 1, 128>}, {transform_indices = @transform_5, window_bounds = array<i64: 1>}, {pipeline_mode = #tpu.pipeline_mode<synchronous>, transform_indices = @transform_6, window_bounds = array<i64: 128, 128>}, {transform_indices = @transform_7, window_bounds = array<i64: 128, 128>}]} {
    %c0_i32 = arith.constant 0 : i32
    %0 = arith.cmpi eq, %arg1, %c0_i32 : i32
    %1 = arith.extui %0 : i1 to i32
    %c0_i32_0 = arith.constant 0 : i32
    %2 = arith.cmpi ne, %1, %c0_i32_0 : i32
    scf.if %2 {
      %cst_9 = arith.constant 0.000000e+00 : f32
      %12 = vector.broadcast %cst_9 : f32 to vector<128x128xf32>
      %c0_10 = arith.constant 0 : index
      %c0_11 = arith.constant 0 : index
      %13 = vector.load %arg10[%c0_10, %c0_11] : memref<128x128xf32, #tpu.memory_space<vmem>>, vector<128x128xf32>
      tpu.vector_store %arg10[%c0_10, %c0_11], %12 {strides = array<i32>} : memref<128x128xf32, #tpu.memory_space<vmem>>, vector<128x128xf32>,
    } else {
    }
    %c0 = arith.constant 0 : index
    %c0_1 = arith.constant 0 : index
    %3 = vector.load %arg10[%c0, %c0_1] : memref<128x128xf32, #tpu.memory_space<vmem>>, vector<128x128xf32>
    %c0_2 = arith.constant 0 : index
    %c0_3 = arith.constant 0 : index
    %4 = vector.load %arg2[%c0_2, %c0_3] : memref<128x128xbf16, #tpu.memory_space<vmem>>, vector<128x128xbf16>
    %c0_4 = arith.constant 0 : index
    %c0_5 = arith.constant 0 : index
    %5 = vector.load %arg3[%c0_4, %c0_5] : memref<128x128xbf16, #tpu.memory_space<vmem>>, vector<128x128xbf16>
    %cst = arith.constant dense<0.000000e+00> : vector<128x128xf32>
    %6 = tpu.matmul %4, %5, %cst {dimension_numbers = #tpu.dot_dimension_numbers<[1], [0], [0], [1], [0, 0, 1, 1], [], []>} : vector<128x128xbf16>, vector<128x128xbf16>, vector<128x128xf32> -> vector<128x128xf32>
    %7 = arith.addf %3, %6 : vector<128x128xf32>
    %c0_6 = arith.constant 0 : index
    %c0_7 = arith.constant 0 : index
    %8 = vector.load %arg10[%c0_6, %c0_7] : memref<128x128xf32, #tpu.memory_space<vmem>>, vector<128x128xf32>
    tpu.vector_store %arg10[%c0_6, %c0_7], %7 {strides = array<i32>} : memref<128x128xf32, #tpu.memory_space<vmem>>, vector<128x128xf32>,
    %c2_i32 = arith.constant 2 : i32
    %9 = arith.cmpi eq, %arg1, %c2_i32 : i32
    %10 = arith.extui %9 : i1 to i32
    %c0_i32_8 = arith.constant 0 : i32
    %11 = arith.cmpi ne, %10, %c0_i32_8 : i32
    scf.if %11 {
      %c0_9 = arith.constant 0 : index
      %12 = memref.load %arg7[%c0_9] : memref<1xf32, #tpu.memory_space<smem>>
      %cst_10 = arith.constant 1.000000e+00 : f32
      %13 = arith.subf %12, %cst_10 : f32
      %c0_11 = arith.constant 0 : index
      %c0_12 = arith.constant 0 : index
      %14 = vector.load %arg5[%c0_11, %c0_12] : memref<128x1xf32, #tpu.memory_space<vmem>>, vector<128x1xf32>
      %15 = vector.broadcast %13 : f32 to vector<128x1xf32>
      %16 = arith.mulf %15, %14 : vector<128x1xf32>
      %c0_13 = arith.constant 0 : index
      %c0_14 = arith.constant 0 : index
      %17 = vector.load %arg4[%c0_13, %c0_14] : memref<128x128xf32, #tpu.memory_space<vmem>>, vector<128x128xf32>
      %18 = vector.broadcast %16 : vector<128x1xf32> to vector<128x128xf32>
      %19 = arith.mulf %18, %17 : vector<128x128xf32>
      %c0_15 = arith.constant 0 : index
      %c0_16 = arith.constant 0 : index
      %20 = vector.load %arg10[%c0_15, %c0_16] : memref<128x128xf32, #tpu.memory_space<vmem>>, vector<128x128xf32>
      %21 = arith.addf %20, %19 : vector<128x128xf32>
      %c0_17 = arith.constant 0 : index
      %c0_18 = arith.constant 0 : index
      %22 = vector.load %arg6[%c0_17, %c0_18] : memref<1x128xf32, #tpu.memory_space<vmem>>, vector<1x128xf32>
      %23 = vector.broadcast %22 : vector<1x128xf32> to vector<128x128xf32>
      %24 = arith.addf %21, %23 : vector<128x128xf32>
      %cst_19 = arith.constant 0.000000e+00 : f32
      %25 = vector.broadcast %cst_19 : f32 to vector<128x128xf32>
      %26 = arith.maximumf %24, %25 : vector<128x128xf32>
      %27 = arith.truncf %26 : vector<128x128xf32> to vector<128x128xbf16>
      %c0_20 = arith.constant 0 : index
      %c0_21 = arith.constant 0 : index
      %28 = vector.load %arg8[%c0_20, %c0_21] : memref<128x128xbf16, #tpu.memory_space<vmem>>, vector<128x128xbf16>
      %cst_22 = arith.constant dense<0.000000e+00> : vector<128x128xf32>
      %29 = tpu.matmul %27, %28, %cst_22 {dimension_numbers = #tpu.dot_dimension_numbers<[1], [0], [0], [1], [0, 0, 1, 1], [], []>} : vector<128x128xbf16>, vector<128x128xbf16>, vector<128x128xf32> -> vector<128x128xf32>
      %c0_23 = arith.constant 0 : index
      %c0_24 = arith.constant 0 : index
      %30 = vector.load %arg9[%c0_23, %c0_24] : memref<128x128xf32, #tpu.memory_space<vmem>>, vector<128x128xf32>
      tpu.vector_store %arg9[%c0_23, %c0_24], %29 {strides = array<i32>} : memref<128x128xf32, #tpu.memory_space<vmem>>, vector<128x128xf32>,
    } else {
    }
    return
  }
  func.func @transform_0(%arg0: i32, %arg1: i32) -> (i32, i32) {
    %c0_i32 = arith.constant 0 : i32
    return %arg0, %arg1 : i32, i32
  }
  func.func @transform_1(%arg0: i32, %arg1: i32) -> (i32, i32) {
    %c0_i32 = arith.constant 0 : i32
    %c0_i32_0 = arith.constant 0 : i32
    return %arg1, %c0_i32 : i32, i32
  }
  func.func @transform_2(%arg0: i32, %arg1: i32) -> (i32, i32) {
    %c0_i32 = arith.constant 0 : i32
    %c0_i32_0 = arith.constant 0 : i32
    return %arg0, %c0_i32 : i32, i32
  }
  func.func @transform_3(%arg0: i32, %arg1: i32) -> (i32, i32) {
    %c0_i32 = arith.constant 0 : i32
    %c0_i32_0 = arith.constant 0 : i32
    return %arg0, %c0_i32 : i32, i32
  }
  func.func @transform_4(%arg0: i32, %arg1: i32) -> (i32, i32) {
    %c0_i32 = arith.constant 0 : i32
    %c0_i32_0 = arith.constant 0 : i32
    %c0_i32_1 = arith.constant 0 : i32
    return %c0_i32, %c0_i32_0 : i32, i32
  }
  func.func @transform_5(%arg0: i32, %arg1: i32) -> i32 {
    %c0_i32 = arith.constant 0 : i32
    %c0_i32_0 = arith.constant 0 : i32
    return %c0_i32 : i32
  }
  func.func @transform_6(%arg0: i32, %arg1: i32) -> (i32, i32) {
    %c0_i32 = arith.constant 0 : i32
    %c0_i32_0 = arith.constant 0 : i32
    %c0_i32_1 = arith.constant 0 : i32
    return %c0_i32, %c0_i32_0 : i32, i32
  }
  func.func @transform_7(%arg0: i32, %arg1: i32) -> (i32, i32) {
    %c0_i32 = arith.constant 0 : i32
    %c0_i32_0 = arith.constant 0 : i32
    return %arg0, %c0_i32 : i32, i32
  }
}

module attributes {stable_mosaic.version = 11 : i64} {
  func.func @layer2_kernel(%arg0: i32, %arg1: i32, %arg2: memref<128x128xbf16, #tpu.memory_space<vmem>>, %arg3: memref<128x128xbf16, #tpu.memory_space<vmem>>, %arg4: memref<128x128xf32, #tpu.memory_space<vmem>>, %arg5: memref<128x1xf32, #tpu.memory_space<vmem>>, %arg6: memref<1x128xf32, #tpu.memory_space<vmem>>, %arg7: memref<1xf32, #tpu.memory_space<smem>>, %arg8: memref<128x128xf32, #tpu.memory_space<vmem>>, %arg9: memref<128x128xf32, #tpu.memory_space<vmem>>) attributes {dimension_semantics = [#tpu.dimension_semantics<parallel>, #tpu.dimension_semantics<arbitrary>], iteration_bounds = array<i64: 3, 3>, scalar_prefetch = 0 : i64, scratch_operands = 1 : i64, tpu.core_type = #tpu.core_type<tc>, window_params = [{transform_indices = @transform_0, window_bounds = array<i64: 128, 128>}, {transform_indices = @transform_1, window_bounds = array<i64: 128, 128>}, {transform_indices = @transform_2, window_bounds = array<i64: 128, 128>}, {transform_indices = @transform_3, window_bounds = array<i64: 128, 1>}, {pipeline_mode = #tpu.pipeline_mode<synchronous>, transform_indices = @transform_4, window_bounds = array<i64: 1, 128>}, {transform_indices = @transform_5, window_bounds = array<i64: 1>}, {transform_indices = @transform_6, window_bounds = array<i64: 128, 128>}]} {
    %c0_i32 = arith.constant 0 : i32
    %0 = arith.cmpi eq, %arg1, %c0_i32 : i32
    %1 = arith.extui %0 : i1 to i32
    %c0_i32_0 = arith.constant 0 : i32
    %2 = arith.cmpi ne, %1, %c0_i32_0 : i32
    scf.if %2 {
      %cst_9 = arith.constant 0.000000e+00 : f32
      %12 = vector.broadcast %cst_9 : f32 to vector<128x128xf32>
      %c0_10 = arith.constant 0 : index
      %c0_11 = arith.constant 0 : index
      %13 = vector.load %arg9[%c0_10, %c0_11] : memref<128x128xf32, #tpu.memory_space<vmem>>, vector<128x128xf32>
      tpu.vector_store %arg9[%c0_10, %c0_11], %12 {strides = array<i32>} : memref<128x128xf32, #tpu.memory_space<vmem>>, vector<128x128xf32>,
    } else {
    }
    %c0 = arith.constant 0 : index
    %c0_1 = arith.constant 0 : index
    %3 = vector.load %arg9[%c0, %c0_1] : memref<128x128xf32, #tpu.memory_space<vmem>>, vector<128x128xf32>
    %c0_2 = arith.constant 0 : index
    %c0_3 = arith.constant 0 : index
    %4 = vector.load %arg2[%c0_2, %c0_3] : memref<128x128xbf16, #tpu.memory_space<vmem>>, vector<128x128xbf16>
    %c0_4 = arith.constant 0 : index
    %c0_5 = arith.constant 0 : index
    %5 = vector.load %arg3[%c0_4, %c0_5] : memref<128x128xbf16, #tpu.memory_space<vmem>>, vector<128x128xbf16>
    %cst = arith.constant dense<0.000000e+00> : vector<128x128xf32>
    %6 = tpu.matmul %4, %5, %cst {dimension_numbers = #tpu.dot_dimension_numbers<[1], [0], [0], [1], [0, 0, 1, 1], [], []>} : vector<128x128xbf16>, vector<128x128xbf16>, vector<128x128xf32> -> vector<128x128xf32>
    %7 = arith.addf %3, %6 : vector<128x128xf32>
    %c0_6 = arith.constant 0 : index
    %c0_7 = arith.constant 0 : index
    %8 = vector.load %arg9[%c0_6, %c0_7] : memref<128x128xf32, #tpu.memory_space<vmem>>, vector<128x128xf32>
    tpu.vector_store %arg9[%c0_6, %c0_7], %7 {strides = array<i32>} : memref<128x128xf32, #tpu.memory_space<vmem>>, vector<128x128xf32>,
    %c2_i32 = arith.constant 2 : i32
    %9 = arith.cmpi eq, %arg1, %c2_i32 : i32
    %10 = arith.extui %9 : i1 to i32
    %c0_i32_8 = arith.constant 0 : i32
    %11 = arith.cmpi ne, %10, %c0_i32_8 : i32
    scf.if %11 {
      %c0_9 = arith.constant 0 : index
      %c0_10 = arith.constant 0 : index
      %12 = vector.load %arg9[%c0_9, %c0_10] : memref<128x128xf32, #tpu.memory_space<vmem>>, vector<128x128xf32>
      %c0_11 = arith.constant 0 : index
      %13 = memref.load %arg7[%c0_11] : memref<1xf32, #tpu.memory_space<smem>>
      %cst_12 = arith.constant 1.000000e+00 : f32
      %14 = arith.subf %13, %cst_12 : f32
      %c0_13 = arith.constant 0 : index
      %c0_14 = arith.constant 0 : index
      %15 = vector.load %arg5[%c0_13, %c0_14] : memref<128x1xf32, #tpu.memory_space<vmem>>, vector<128x1xf32>
      %16 = vector.broadcast %14 : f32 to vector<128x1xf32>
      %17 = arith.mulf %16, %15 : vector<128x1xf32>
      %c0_15 = arith.constant 0 : index
      %c0_16 = arith.constant 0 : index
      %18 = vector.load %arg4[%c0_15, %c0_16] : memref<128x128xf32, #tpu.memory_space<vmem>>, vector<128x128xf32>
      %19 = vector.broadcast %17 : vector<128x1xf32> to vector<128x128xf32>
      %20 = arith.mulf %19, %18 : vector<128x128xf32>
      %21 = arith.addf %12, %20 : vector<128x128xf32>
      %c0_17 = arith.constant 0 : index
      %c0_18 = arith.constant 0 : index
      %22 = vector.load %arg6[%c0_17, %c0_18] : memref<1x128xf32, #tpu.memory_space<vmem>>, vector<1x128xf32>
      %23 = vector.broadcast %22 : vector<1x128xf32> to vector<128x128xf32>
      %24 = arith.addf %21, %23 : vector<128x128xf32>
      %25 = tpu.iota {dimensions = array<i32: 1>} : vector<128x128xi32>
      %c8_i32 = arith.constant 8 : i32
      %26 = vector.broadcast %c8_i32 : i32 to vector<128x128xi32>
      %27 = arith.cmpi slt, %25, %26 : vector<128x128xi32>
      %cst_19 = arith.constant -1.000000e+30 : f32
      %28 = vector.broadcast %cst_19 : f32 to vector<128x128xf32>
      %29 = arith.select %27, %24, %28 : vector<128x128xi1>, vector<128x128xf32>
      %cst_20 = arith.constant dense<0xFF800000> : vector<128xf32>
      %30 = vector.multi_reduction <maximumf>, %29, %cst_20 [1] : vector<128x128xf32> to vector<128xf32>
      %31 = vector.shape_cast %30 : vector<128xf32> to vector<128x1xf32>
      %32 = vector.broadcast %31 : vector<128x1xf32> to vector<128x128xf32>
      %33 = arith.subf %29, %32 : vector<128x128xf32>
      %34 = math.exp %33 : vector<128x128xf32>
      %cst_21 = arith.constant dense<0.000000e+00> : vector<128xf32>
      %35 = vector.multi_reduction <add>, %34, %cst_21 [1] : vector<128x128xf32> to vector<128xf32>
      %36 = vector.shape_cast %35 : vector<128xf32> to vector<128x1xf32>
      %37 = math.log %36 : vector<128x1xf32>
      %38 = vector.broadcast %37 : vector<128x1xf32> to vector<128x128xf32>
      %39 = arith.subf %33, %38 : vector<128x128xf32>
      %c0_22 = arith.constant 0 : index
      %c0_23 = arith.constant 0 : index
      %40 = vector.load %arg8[%c0_22, %c0_23] : memref<128x128xf32, #tpu.memory_space<vmem>>, vector<128x128xf32>
      tpu.vector_store %arg8[%c0_22, %c0_23], %39 {strides = array<i32>} : memref<128x128xf32, #tpu.memory_space<vmem>>, vector<128x128xf32>,
    } else {
    }
    return
  }
  func.func @transform_0(%arg0: i32, %arg1: i32) -> (i32, i32) {
    %c0_i32 = arith.constant 0 : i32
    return %arg0, %arg1 : i32, i32
  }
  func.func @transform_1(%arg0: i32, %arg1: i32) -> (i32, i32) {
    %c0_i32 = arith.constant 0 : i32
    %c0_i32_0 = arith.constant 0 : i32
    return %arg1, %c0_i32 : i32, i32
  }
  func.func @transform_2(%arg0: i32, %arg1: i32) -> (i32, i32) {
    %c0_i32 = arith.constant 0 : i32
    %c0_i32_0 = arith.constant 0 : i32
    return %arg0, %c0_i32 : i32, i32
  }
  func.func @transform_3(%arg0: i32, %arg1: i32) -> (i32, i32) {
    %c0_i32 = arith.constant 0 : i32
    %c0_i32_0 = arith.constant 0 : i32
    return %arg0, %c0_i32 : i32, i32
  }
  func.func @transform_4(%arg0: i32, %arg1: i32) -> (i32, i32) {
    %c0_i32 = arith.constant 0 : i32
    %c0_i32_0 = arith.constant 0 : i32
    %c0_i32_1 = arith.constant 0 : i32
    return %c0_i32, %c0_i32_0 : i32, i32
  }
  func.func @transform_5(%arg0: i32, %arg1: i32) -> i32 {
    %c0_i32 = arith.constant 0 : i32
    %c0_i32_0 = arith.constant 0 : i32
    return %c0_i32 : i32
  }
  func.func @transform_6(%arg0: i32, %arg1: i32) -> (i32, i32) {
    %c0_i32 = arith.constant 0 : i32
    %c0_i32_0 = arith.constant 0 : i32
    return %arg0, %c0_i32 : i32, i32
  }
}

</mosaic_0001>

<llo_original>
// kernel: gnn_forward.2
$region0: #{gnn_forward.2}
  #allocation0 [shape = 'u32[]', space=smem, size = 0x4, offset = 0x4, fixed_abs, tag = 'smem constant byte address 0x4 - core index']
  #allocation1 [shape = 'u32[144,128]{1,0:T(1,128)}', space=vmem, size = 0x12000, scoped, tag = 'internal scratch']
  #allocation2 [shape = 'f32[128,128]{1,0:T(8,128)}', space=vmem, size = 0x10000, scoped, tag = 'scratch operand']
  #allocation3 [shape = 'f32[1]{0:T(128)S(6)}', space=smem, size = 0x200, scoped, tag = 'scoped memory for gnn_forward.2']
  %s0 = inlined_call_operand.vmem [shape: bf16[384,384], index: 0, kind: input, shape index: {}]
  %s1 = inlined_call_operand.vmem [shape: bf16[384,128], index: 1, kind: input, shape index: {}]
  %s2 = inlined_call_operand.vmem [shape: f32[384,128], index: 2, kind: input, shape index: {}]
  %s3 = inlined_call_operand.vmem [shape: f32[384,1], index: 3, kind: input, shape index: {}]
  %s4 = inlined_call_operand.vmem [shape: f32[1,128], index: 4, kind: input, shape index: {}]
  %s5 = inlined_call_operand.<no memory space> [shape: f32[1], index: 5, kind: input, shape index: {}]
  %s6 = inlined_call_operand.vmem [shape: bf16[128,128], index: 6, kind: input, shape index: {}]
  %s7 = inlined_call_operand.vmem [shape: f32[384,128], index: 7, kind: output, shape index: {}]
  %s8 = sld [smem:[#allocation0]]
  $region110: #{gnn_forward.2} parent=0
    _
  %s10 = ssub.s32 1, %s8
  %s11 = scalar_select 0, %s10, %s8
  %12 = sst [smem:[#allocation3]] %s5
  $region1: #{gnn_forward.2} parent=0
    #allocation4 [shape = 'u8[65536]{0}', space=vmem, size = 0x10000, scoped, tag = 'input window, operand 0']
    loop: start=0, step=1, limit=11
    $region2: #{gnn_forward.2} parent=1 // loop_pre_header
      _
    $region3: #{gnn_forward.2} parent=1 // loop_header
      %s14 = sphi 0, %s18
      %p15 = scmp.ge.s32.totalorder %s14, 11
      %s21 = sphi 0, %s33
      %s22 = sphi 0, %s29
      %s23 = sphi 0, %s21
      %s24 = sphi 0, %s22
      %s25 = sphi 0, %s23
      %s26 = sphi 0, %s24
      %s38 = sphi 0, %s40
      %s41 = sphi 0, %s38
      %s42 = sphi 0, %s41
      %s58 = sphi 0, %s42
      %s64 = sphi 0, %s66
      %s67 = sphi 0, %s64
      %s68 = sphi 0, %s67
      %s84 = sphi 0, %s68
      %s90 = sphi 0, %s92
      %s93 = sphi 0, %s90
      %s94 = sphi 0, %s93
      %s110 = sphi 0, %s94
      %s116 = sphi 0, %s118
      %s119 = sphi 0, %s116
      %s120 = sphi 0, %s119
      %s136 = sphi 0, %s120
      %s140 = sphi 0, %s140
      %s142 = sphi 0, %s140
      %s143 = sphi 0, %s142
      %s157 = sphi 0, %s143
      %s161 = sphi 0, %s161
      %s163 = sphi 0, %s161
      %s164 = sphi 0, %s163
      %s178 = sphi 0, %s164
      %s182 = sphi 0, %s182
      %s184 = sphi 0, %s182
      %s185 = sphi 0, %s184
      %s199 = sphi 0, %s185
      %s205 = sphi 0, %s207
      %s208 = sphi 0, %s205
      %s209 = sphi 0, %s208
      %s225 = sphi 0, %s209
    $region4: #{gnn_forward.2} parent=1 // loop_header_branch
      %17 = sbr.rel (%p15) target = $region8
    $region5: #{gnn_forward.2} parent=1 // loop_body
      %s19 = ssub.s32 %s14, 1
      %s20 = ssub.s32 %s14, 2
      %s27 = sadd.s32 1, %s22
      %p28 = scmp.ge.s32.totalorder %s27, 3
      %s29 = scalar_select %p28, 0, %s27
      %s30 = sadd.s32 1, %s21
      %s31 = scalar_select %p28, %s30, %s21
      %p32 = scmp.ge.s32.totalorder %s31, 3
      %s33 = scalar_select %p32, 0, %s31
      %s34 = ssub.s32 %s21, %s33
      %s35 = ssub.s32 %s22, %s29
      %s36 = sor.u32 %s34, %s35
      %p37 = scmp.eq.s32.totalorder %s36, 0
      %s39 = sadd.s32 %s38, 1
      %s40 = scalar_select %p37, %s38, %s39
      %p43 = pneg %p37
      %p44 = scmp.eq.s32.totalorder %s14, 8
      %p45 = por %p43, %p44
      %p46 = scmp.ne.s32.totalorder %s38, %s41
      %p47 = scmp.eq.s32.totalorder %s14, 0
      %p48 = por %p46, %p47
      %p49 = scmp.ne.s32.totalorder %s38, %s41
      %p50 = scmp.eq.s32.totalorder %s19, 8
      %p51 = por %p49, %p50
      %p52 = scmp.ne.s32.totalorder %s41, %s42
      %p53 = scmp.eq.s32.totalorder %s19, 0
      %p54 = por %p52, %p53
      %p55 = scmp.ne.s32.totalorder %s41, %s42
      %p56 = scmp.eq.s32.totalorder %s20, 8
      %p57 = por %p55, %p56
      %p59 = scmp.ne.s32.totalorder %s42, %s58
      %p60 = scmp.eq.s32.totalorder %s20, 0
      %p61 = por %p59, %p60
      %s62 = ssub.s32 %s22, %s29
      %p63 = scmp.eq.s32.totalorder %s62, 0
      %s65 = sadd.s32 %s64, 1
      %s66 = scalar_select %p63, %s64, %s65
      %p69 = pneg %p63
      %p70 = scmp.eq.s32.totalorder %s14, 8
      %p71 = por %p69, %p70
      %p72 = scmp.ne.s32.totalorder %s64, %s67
      %p73 = scmp.eq.s32.totalorder %s14, 0
      %p74 = por %p72, %p73
      %p75 = scmp.ne.s32.totalorder %s64, %s67
      %p76 = scmp.eq.s32.totalorder %s19, 8
      %p77 = por %p75, %p76
      %p78 = scmp.ne.s32.totalorder %s67, %s68
      %p79 = scmp.eq.s32.totalorder %s19, 0
      %p80 = por %p78, %p79
      %p81 = scmp.ne.s32.totalorder %s67, %s68
      %p82 = scmp.eq.s32.totalorder %s20, 8
      %p83 = por %p81, %p82
      %p85 = scmp.ne.s32.totalorder %s68, %s84
      %p86 = scmp.eq.s32.totalorder %s20, 0
      %p87 = por %p85, %p86
      %s88 = ssub.s32 %s21, %s33
      %p89 = scmp.eq.s32.totalorder %s88, 0
      %s91 = sadd.s32 %s90, 1
      %s92 = scalar_select %p89, %s90, %s91
      %p95 = pneg %p89
      %p96 = scmp.eq.s32.totalorder %s14, 8
      %p97 = por %p95, %p96
      %p98 = scmp.ne.s32.totalorder %s90, %s93
      %p99 = scmp.eq.s32.totalorder %s14, 0
      %p100 = por %p98, %p99
      %p101 = scmp.ne.s32.totalorder %s90, %s93
      %p102 = scmp.eq.s32.totalorder %s19, 8
      %p103 = por %p101, %p102
      %p104 = scmp.ne.s32.totalorder %s93, %s94
      %p105 = scmp.eq.s32.totalorder %s19, 0
      %p106 = por %p104, %p105
      %p107 = scmp.ne.s32.totalorder %s93, %s94
      %p108 = scmp.eq.s32.totalorder %s20, 8
      %p109 = por %p107, %p108
      %p111 = scmp.ne.s32.totalorder %s94, %s110
      %p112 = scmp.eq.s32.totalorder %s20, 0
      %p113 = por %p111, %p112
      %s114 = ssub.s32 %s21, %s33
      %p115 = scmp.eq.s32.totalorder %s114, 0
      %s117 = sadd.s32 %s116, 1
      %s118 = scalar_select %p115, %s116, %s117
      %p121 = pneg %p115
      %p122 = scmp.eq.s32.totalorder %s14, 8
      %p123 = por %p121, %p122
      %p124 = scmp.ne.s32.totalorder %s116, %s119
      %p125 = scmp.eq.s32.totalorder %s14, 0
      %p126 = por %p124, %p125
      %p127 = scmp.ne.s32.totalorder %s116, %s119
      %p128 = scmp.eq.s32.totalorder %s19, 8
      %p129 = por %p127, %p128
      %p130 = scmp.ne.s32.totalorder %s119, %s120
      %p131 = scmp.eq.s32.totalorder %s19, 0
      %p132 = por %p130, %p131
      %p133 = scmp.ne.s32.totalorder %s119, %s120
      %p134 = scmp.eq.s32.totalorder %s20, 8
      %p135 = por %p133, %p134
      %p137 = scmp.ne.s32.totalorder %s120, %s136
      %p138 = scmp.eq.s32.totalorder %s20, 0
      %p139 = por %p137, %p138
      %s141 = sadd.s32 %s140, 1
      %p144 = scmp.eq.s32.totalorder %s14, 8
      %p145 = scmp.ne.s32.totalorder %s140, %s142
      %p146 = scmp.eq.s32.totalorder %s14, 0
      %p147 = por %p145, %p146
      %p148 = scmp.ne.s32.totalorder %s140, %s142
      %p149 = scmp.eq.s32.totalorder %s19, 8
      %p150 = por %p148, %p149
      %p151 = scmp.ne.s32.totalorder %s142, %s143
      %p152 = scmp.eq.s32.totalorder %s19, 0
      %p153 = por %p151, %p152
      %p154 = scmp.ne.s32.totalorder %s142, %s143
      %p155 = scmp.eq.s32.totalorder %s20, 8
      %p156 = por %p154, %p155
      %p158 = scmp.ne.s32.totalorder %s143, %s157
      %p159 = scmp.eq.s32.totalorder %s20, 0
      %p160 = por %p158, %p159
      %s162 = sadd.s32 %s161, 1
      %p165 = scmp.eq.s32.totalorder %s14, 8
      %p166 = scmp.ne.s32.totalorder %s161, %s163
      %p167 = scmp.eq.s32.totalorder %s14, 0
      %p168 = por %p166, %p167
      %p169 = scmp.ne.s32.totalorder %s161, %s163
      %p170 = scmp.eq.s32.totalorder %s19, 8
      %p171 = por %p169, %p170
      %p172 = scmp.ne.s32.totalorder %s163, %s164
      %p173 = scmp.eq.s32.totalorder %s19, 0
      %p174 = por %p172, %p173
      %p175 = scmp.ne.s32.totalorder %s163, %s164
      %p176 = scmp.eq.s32.totalorder %s20, 8
      %p177 = por %p175, %p176
      %p179 = scmp.ne.s32.totalorder %s164, %s178
      %p180 = scmp.eq.s32.totalorder %s20, 0
      %p181 = por %p179, %p180
      %s183 = sadd.s32 %s182, 1
      %p186 = scmp.eq.s32.totalorder %s14, 8
      %p187 = scmp.ne.s32.totalorder %s182, %s184
      %p188 = scmp.eq.s32.totalorder %s14, 0
      %p189 = por %p187, %p188
      %p190 = scmp.ne.s32.totalorder %s182, %s184
      %p191 = scmp.eq.s32.totalorder %s19, 8
      %p192 = por %p190, %p191
      %p193 = scmp.ne.s32.totalorder %s184, %s185
      %p194 = scmp.eq.s32.totalorder %s19, 0
      %p195 = por %p193, %p194
      %p196 = scmp.ne.s32.totalorder %s184, %s185
      %p197 = scmp.eq.s32.totalorder %s20, 8
      %p198 = por %p196, %p197
      %p200 = scmp.ne.s32.totalorder %s185, %s199
      %p201 = scmp.eq.s32.totalorder %s20, 0
      %p202 = por %p200, %p201
      %s203 = ssub.s32 %s21, %s33
      %p204 = scmp.eq.s32.totalorder %s203, 0
      %s206 = sadd.s32 %s205, 1
      %s207 = scalar_select %p204, %s205, %s206
      %p210 = pneg %p204
      %p211 = scmp.eq.s32.totalorder %s14, 8
      %p212 = por %p210, %p211
      %p213 = scmp.ne.s32.totalorder %s205, %s208
      %p214 = scmp.eq.s32.totalorder %s14, 0
      %p215 = por %p213, %p214
      %p216 = scmp.ne.s32.totalorder %s205, %s208
      %p217 = scmp.eq.s32.totalorder %s19, 8
      %p218 = por %p216, %p217
      %p219 = scmp.ne.s32.totalorder %s208, %s209
      %p220 = scmp.eq.s32.totalorder %s19, 0
      %p221 = por %p219, %p220
      %p222 = scmp.ne.s32.totalorder %s208, %s209
      %p223 = scmp.eq.s32.totalorder %s20, 8
      %p224 = por %p222, %p223
      %p226 = scmp.ne.s32.totalorder %s209, %s225
      %p227 = scmp.eq.s32.totalorder %s20, 0
      %p228 = por %p226, %p227
      %p229 = scmp.le.s32.totalorder 1, %s14
      %p230 = scmp.lt.s32.totalorder %s14, 10
      %p231 = pnand %p229, %p230
      %p232 = pneg %p231
      // Predicated region
      $region9: #{gnn_forward.2} parent=5 // pred_check
        _
      $region10: #{gnn_forward.2} parent=5 // pred_check_branch
        %234 = sbr.rel (%p231) target = $region12
      $region11: #{gnn_forward.2} parent=5 // pred_region
        %s235 = ssub.s32 %s14, 1
        // Predicated region
        $region13: #{gnn_forward.2} parent=11 // pred_check
          %p236 = pneg %p153
        $region14: #{gnn_forward.2} parent=11 // pred_check_branch
          %238 = sbr.rel (%p236) target = $region16
        $region15: #{gnn_forward.2} parent=11 // pred_region
          _
        $region16: #{gnn_forward.2} parent=11 // pred_fallthru
          _
        // Predicated region
        $region17: #{gnn_forward.2} parent=11 // pred_check
          %p239 = pneg %p174
        $region18: #{gnn_forward.2} parent=11 // pred_check_branch
          %241 = sbr.rel (%p239) target = $region20
        $region19: #{gnn_forward.2} parent=11 // pred_region
          _
        $region20: #{gnn_forward.2} parent=11 // pred_fallthru
          _
        // Predicated region
        $region21: #{gnn_forward.2} parent=11 // pred_check
          %p242 = pneg %p195
        $region22: #{gnn_forward.2} parent=11 // pred_check_branch
          %244 = sbr.rel (%p242) target = $region24
        $region23: #{gnn_forward.2} parent=11 // pred_region
          _
        $region24: #{gnn_forward.2} parent=11 // pred_fallthru
          _
      $region12: #{gnn_forward.2} parent=5 // pred_fallthru
        _
      %p245 = scmp.lt.s32.totalorder %s14, 9
      // Predicated region
      $region25: #{gnn_forward.2} parent=5 // pred_check
        %p246 = pneg %p245
      $region26: #{gnn_forward.2} parent=5 // pred_check_branch
        %248 = sbr.rel (%p246) target = $region28
      $region27: #{gnn_forward.2} parent=5 // pred_region
        // Predicated region
        $region29: #{gnn_forward.2} parent=27 // pred_check
          %p249 = pneg %p48
        $region30: #{gnn_forward.2} parent=27 // pred_check_branch
          %251 = sbr.rel (%p249) target = $region32
        $region31: #{gnn_forward.2} parent=27 // pred_region
          %s252 = sand.u32 %s38, 1
          %s253 = sand.u32 %s38, 1
          %s254 = smul.addr %s253, 64
          %s255 = scalar_lea.vmem [#allocation4], %s254
          %s256 = smul.u32 16, %s21
          %s257 = smul.addr %s256, 3
          %s258 = sadd.s32 %s22, %s257
          %s259 = smul.addr %s258, 4
          %s260 = scalar_lea.vmem %s0, %s259
          // Predicated region
          $region33: #{gnn_forward.2} parent=31 // pred_check
            _
          $region34: #{gnn_forward.2} parent=31 // pred_check_branch
            %262 = sbr.rel (0) target = $region36
          $region35: #{gnn_forward.2} parent=31 // pred_region
            // Predicated region
            $region37: #{gnn_forward.2} parent=35 // pred_check
              _
            $region38: #{gnn_forward.2} parent=35 // pred_check_branch
              %264 = sbr.rel target = $region40
            $region39: #{gnn_forward.2} parent=35 // pred_region
              // Predicated region
              $region52: #{gnn_forward.2} parent=39 // pred_check
                _
              $region53: #{gnn_forward.2} parent=39 // pred_check_branch
                %310 = sbr.rel (0) target = $region55
              $region54: #{gnn_forward.2} parent=39 // pred_region
                loop: start=0, step=1, limit=1
                $region56: #{gnn_forward.2} parent=54 // loop_pre_header
                  _
                $region57: #{gnn_forward.2} parent=54 // loop_header
                  %s312 = sphi 0, %s316
                  %p313 = scmp.ge.s32.totalorder %s312, 1
                  %s317 = sphi %s260, %s260
                  %s318 = sphi %s255, %s255
                $region58: #{gnn_forward.2} parent=54 // loop_header_branch
                  %315 = sbr.rel (%p313) target = $region62
                $region59: #{gnn_forward.2} parent=54 // loop_body
                  _
                $region60: #{gnn_forward.2} parent=54 // loop_footer
                  %s316 = sadd.s32 1, %s312
                $region61: #{gnn_forward.2} parent=54 // loop_footer_branch
                  %311 = sbr.rel target = $region57
                $region62: #{gnn_forward.2} parent=54 // loop_exit
                  _
                %s320 = ssub.s32 16, 1
                loop: start=0, step=1, limit=1
                $region63: #{gnn_forward.2} parent=54 // loop_pre_header
                  _
                $region64: #{gnn_forward.2} parent=54 // loop_header
                  %s322 = sphi 0, %s326
                  %p323 = scmp.ge.s32.totalorder %s322, 1
                  %s327 = sphi %s260, %s260
                  %s328 = sphi %s255, %s255
                $region65: #{gnn_forward.2} parent=54 // loop_header_branch
                  %325 = sbr.rel (%p323) target = $region69
                $region66: #{gnn_forward.2} parent=54 // loop_body
                  %v329 = vld [vmem:[%s327] sm:%s320]
                  %330 = vst [vmem:[%s328] sm:%s320] %v329
                  %v331 = vld [vmem:[%s327 + $0xc] sm:%s320]
                  %332 = vst [vmem:[%s328 + $0x4] sm:%s320] %v331
                  %v333 = vld [vmem:[%s327 + $0x18] sm:%s320]
                  %334 = vst [vmem:[%s328 + $0x8] sm:%s320] %v333
                  %v335 = vld [vmem:[%s327 + $0x24] sm:%s320]
                  %336 = vst [vmem:[%s328 + $0xc] sm:%s320] %v335
                  %v337 = vld [vmem:[%s327 + $0x30] sm:%s320]
                  %338 = vst [vmem:[%s328 + $0x10] sm:%s320] %v337
                  %v339 = vld [vmem:[%s327 + $0x3c] sm:%s320]
                  %340 = vst [vmem:[%s328 + $0x14] sm:%s320] %v339
                  %v341 = vld [vmem:[%s327 + $0x48] sm:%s320]
                  %342 = vst [vmem:[%s328 + $0x18] sm:%s320] %v341
                  %v343 = vld [vmem:[%s327 + $0x54] sm:%s320]
                  %344 = vst [vmem:[%s328 + $0x1c] sm:%s320] %v343
                  %v345 = vld [vmem:[%s327 + $0x60] sm:%s320]
                  %346 = vst [vmem:[%s328 + $0x20] sm:%s320] %v345
                  %v347 = vld [vmem:[%s327 + $0x6c] sm:%s320]
                  %348 = vst [vmem:[%s328 + $0x24] sm:%s320] %v347
                  %v349 = vld [vmem:[%s327 + $0x78] sm:%s320]
                  %350 = vst [vmem:[%s328 + $0x28] sm:%s320] %v349
                  %v351 = vld [vmem:[%s327 + $0x84] sm:%s320]
                  %352 = vst [vmem:[%s328 + $0x2c] sm:%s320] %v351
                  %v353 = vld [vmem:[%s327 + $0x90] sm:%s320]
                  %354 = vst [vmem:[%s328 + $0x30] sm:%s320] %v353
                  %v355 = vld [vmem:[%s327 + $0x9c] sm:%s320]
                  %356 = vst [vmem:[%s328 + $0x34] sm:%s320] %v355
                  %v357 = vld [vmem:[%s327 + $0xa8] sm:%s320]
                  %358 = vst [vmem:[%s328 + $0x38] sm:%s320] %v357
                  %v359 = vld [vmem:[%s327 + $0xb4] sm:%s320]
                  %360 = vst [vmem:[%s328 + $0x3c] sm:%s320] %v359
                $region67: #{gnn_forward.2} parent=54 // loop_footer
                  %s326 = sadd.s32 1, %s322
                $region68: #{gnn_forward.2} parent=54 // loop_footer_branch
                  %321 = sbr.rel target = $region64
                $region69: #{gnn_forward.2} parent=54 // loop_exit
                  _
              $region55: #{gnn_forward.2} parent=39 // pred_fallthru
                _
            $region40: #{gnn_forward.2} parent=35 // pred_fallthru
              _
            // Predicated region
            $region41: #{gnn_forward.2} parent=35 // pred_check
              _
            $region42: #{gnn_forward.2} parent=35 // pred_check_branch
              %266 = sbr.rel (0) target = $region44
            $region43: #{gnn_forward.2} parent=35 // pred_region
              %s268 = ssub.s32 16, 1
              loop: start=0, step=1, limit=1
              $region45: #{gnn_forward.2} parent=43 // loop_pre_header
                _
              $region46: #{gnn_forward.2} parent=43 // loop_header
                %s270 = sphi 0, %s274
                %p271 = scmp.ge.s32.totalorder %s270, 1
                %s275 = sphi %s260, %s260
                %s276 = sphi %s255, %s255
              $region47: #{gnn_forward.2} parent=43 // loop_header_branch
                %273 = sbr.rel (%p271) target = $region51
              $region48: #{gnn_forward.2} parent=43 // loop_body
                %v277 = vld [vmem:[%s275] sm:%s268]
                %278 = vst [vmem:[%s276] sm:%s268] %v277
                %v279 = vld [vmem:[%s275 + $0xc] sm:%s268]
                %280 = vst [vmem:[%s276 + $0x4] sm:%s268] %v279
                %v281 = vld [vmem:[%s275 + $0x18] sm:%s268]
                %282 = vst [vmem:[%s276 + $0x8] sm:%s268] %v281
                %v283 = vld [vmem:[%s275 + $0x24] sm:%s268]
                %284 = vst [vmem:[%s276 + $0xc] sm:%s268] %v283
                %v285 = vld [vmem:[%s275 + $0x30] sm:%s268]
                %286 = vst [vmem:[%s276 + $0x10] sm:%s268] %v285
                %v287 = vld [vmem:[%s275 + $0x3c] sm:%s268]
                %288 = vst [vmem:[%s276 + $0x14] sm:%s268] %v287
                %v289 = vld [vmem:[%s275 + $0x48] sm:%s268]
                %290 = vst [vmem:[%s276 + $0x18] sm:%s268] %v289
                %v291 = vld [vmem:[%s275 + $0x54] sm:%s268]
                %292 = vst [vmem:[%s276 + $0x1c] sm:%s268] %v291
                %v293 = vld [vmem:[%s275 + $0x60] sm:%s268]
                %294 = vst [vmem:[%s276 + $0x20] sm:%s268] %v293
                %v295 = vld [vmem:[%s275 + $0x6c] sm:%s268]
                %296 = vst [vmem:[%s276 + $0x24] sm:%s268] %v295
                %v297 = vld [vmem:[%s275 + $0x78] sm:%s268]
                %298 = vst [vmem:[%s276 + $0x28] sm:%s268] %v297
                %v299 = vld [vmem:[%s275 + $0x84] sm:%s268]
                %300 = vst [vmem:[%s276 + $0x2c] sm:%s268] %v299
                %v301 = vld [vmem:[%s275 + $0x90] sm:%s268]
                %302 = vst [vmem:[%s276 + $0x30] sm:%s268] %v301
                %v303 = vld [vmem:[%s275 + $0x9c] sm:%s268]
                %304 = vst [vmem:[%s276 + $0x34] sm:%s268] %v303
                %v305 = vld [vmem:[%s275 + $0xa8] sm:%s268]
                %306 = vst [vmem:[%s276 + $0x38] sm:%s268] %v305
                %v307 = vld [vmem:[%s275 + $0xb4] sm:%s268]
                %308 = vst [vmem:[%s276 + $0x3c] sm:%s268] %v307
              $region49: #{gnn_forward.2} parent=43 // loop_footer
                %s274 = sadd.s32 1, %s270
              $region50: #{gnn_forward.2} parent=43 // loop_footer_branch
                %269 = sbr.rel target = $region46
              $region51: #{gnn_forward.2} parent=43 // loop_exit
                _
            $region44: #{gnn_forward.2} parent=35 // pred_fallthru
              _
          $region36: #{gnn_forward.2} parent=31 // pred_fallthru
            _
          %361 = vnop
        $region32: #{gnn_forward.2} parent=27 // pred_fallthru
          _
        // Predicated region
        $region70: #{gnn_forward.2} parent=27 // pred_check
          %p362 = pneg %p74
        $region71: #{gnn_forward.2} parent=27 // pred_check_branch
          %364 = sbr.rel (%p362) target = $region73
        $region72: #{gnn_forward.2} parent=27 // pred_region
          %s365 = smul.u32 16, %s22
          %p366 = scmp.lt.s32.totalorder %s365, 47
          %s367 = scalar_select %p366, %s365, 47
          %s368 = smul.addr %s367, 4
          %s369 = scalar_lea.vmem %s1, %s368
          %s370 = smul.u32 16, %s22
        $region73: #{gnn_forward.2} parent=27 // pred_fallthru
          _
        // Predicated region
        $region74: #{gnn_forward.2} parent=27 // pred_check
          %p371 = pneg %p100
        $region75: #{gnn_forward.2} parent=27 // pred_check_branch
          %373 = sbr.rel (%p371) target = $region77
        $region76: #{gnn_forward.2} parent=27 // pred_region
          %s374 = smul.u32 16, %s21
          %p375 = scmp.lt.s32.totalorder %s374, 47
          %s376 = scalar_select %p375, %s374, 47
          %s377 = smul.addr %s376, 8
          %s378 = scalar_lea.vmem %s2, %s377
          %s379 = smul.u32 16, %s21
        $region77: #{gnn_forward.2} parent=27 // pred_fallthru
          _
        // Predicated region
        $region78: #{gnn_forward.2} parent=27 // pred_check
          %p380 = pneg %p126
        $region79: #{gnn_forward.2} parent=27 // pred_check_branch
          %382 = sbr.rel (%p380) target = $region81
        $region80: #{gnn_forward.2} parent=27 // pred_region
          %s383 = smul.u32 16, %s21
          %p384 = scmp.lt.s32.totalorder %s383, 47
          %s385 = scalar_select %p384, %s383, 47
          %s386 = smul.addr %s385, 8
          %s387 = scalar_lea.vmem %s3, %s386
          %s388 = smul.u32 16, %s21
        $region81: #{gnn_forward.2} parent=27 // pred_fallthru
          _
      $region28: #{gnn_forward.2} parent=5 // pred_fallthru
        _
      %p389 = scmp.le.s32.totalorder 1, %s14
      %p390 = scmp.lt.s32.totalorder %s14, 10
      %p391 = pnand %p389, %p390
      %p392 = pneg %p391
      // Predicated region
      $region82: #{gnn_forward.2} parent=5 // pred_check
        _
      $region83: #{gnn_forward.2} parent=5 // pred_check_branch
        %394 = sbr.rel (%p391) target = $region85
      $region84: #{gnn_forward.2} parent=5 // pred_region
        %s395 = ssub.s32 %s14, 1
        %s396 = sand.u32 %s41, 1
        %s397 = sand.u32 %s41, 1
        %s398 = smul.addr %s397, 64
        %s399 = scalar_lea.vmem [#allocation4], %s398
        // Predicated region
        $region86: #{gnn_forward.2} parent=84 // pred_check
          %p400 = pneg %p54
        $region87: #{gnn_forward.2} parent=84 // pred_check_branch
          %402 = sbr.rel (%p400) target = $region89
        $region88: #{gnn_forward.2} parent=84 // pred_region
          _
        $region89: #{gnn_forward.2} parent=84 // pred_fallthru
          _
        %s403 = sand.u32 %s41, 1
        %s404 = sand.u32 %s41, 1
        %s405 = smul.addr %s404, 64
        %s406 = scalar_lea.vmem [#allocation4], %s405
        %p407 = pneg %p54
        %p408 = pneg %p51
        %s409 = smul.u32 16, %s24
        %p410 = scmp.lt.s32.totalorder %s409, 47
        %s411 = scalar_select %p410, %s409, 47
        %s412 = smul.addr %s411, 4
        %s413 = scalar_lea.vmem %s1, %s412
        %p414 = pneg %p80
        %p415 = pneg %p77
        %s416 = smul.u32 16, %s23
        %p417 = scmp.lt.s32.totalorder %s416, 47
        %s418 = scalar_select %p417, %s416, 47
        %s419 = smul.addr %s418, 8
        %s420 = scalar_lea.vmem %s2, %s419
        %p421 = pneg %p106
        %p422 = pneg %p103
        %s423 = smul.u32 16, %s23
        %p424 = scmp.lt.s32.totalorder %s423, 47
        %s425 = scalar_select %p424, %s423, 47
        %s426 = smul.addr %s425, 8
        %s427 = scalar_lea.vmem %s3, %s426
        %p428 = pneg %p132
        %p429 = pneg %p129
        %p430 = pneg %p153
        %p431 = pneg %p150
        %p432 = pneg %p174
        %p433 = pneg %p171
        %p434 = pneg %p195
        %p435 = pneg %p192
        %p436 = pneg %p221
        %p437 = pneg %p218
        %s438 = smul.u32 16, %s23
        %p439 = scmp.lt.s32.totalorder %s438, 47
        %s440 = scalar_select %p439, %s438, 47
        %s441 = smul.addr %s440, 8
        %s442 = scalar_lea.vmem %s7, %s441
        %s443 = smul.u32 16, %s23
        %s444 = smul.u32 16, %s24
        %p445 = scmp.lt.s32.totalorder %s444, 47
        %s446 = scalar_select %p445, %s444, 47
        %s447 = smul.addr %s446, 4
        %s448 = scalar_lea.vmem %s1, %s447
        %s449 = smul.u32 16, %s24
        %s450 = smul.u32 16, %s23
        %p451 = scmp.lt.s32.totalorder %s450, 47
        %s452 = scalar_select %p451, %s450, 47
        %s453 = smul.addr %s452, 8
        %s454 = scalar_lea.vmem %s2, %s453
        %s455 = smul.u32 16, %s23
        %s456 = smul.u32 16, %s23
        %p457 = scmp.lt.s32.totalorder %s456, 47
        %s458 = scalar_select %p457, %s456, 47
        %s459 = smul.addr %s458, 8
        %s460 = scalar_lea.vmem %s3, %s459
        %s461 = smul.u32 16, %s23
        %s462 = smul.u32 16, %s23
        %p463 = scmp.lt.s32.totalorder %s462, 47
        %s464 = scalar_select %p463, %s462, 47
        %s465 = smul.addr %s464, 8
        %s466 = scalar_lea.vmem %s7, %s465
        %s467 = smul.u32 16, %s23
        %p469 = scmp.eq.s32.totalorder %s24, 0
        // Predicated region
        $region90: #{gnn_forward.2} parent=84 // pred_check
          %p470 = pneg %p469
        $region91: #{gnn_forward.2} parent=84 // pred_check_branch
          %472 = sbr.rel (%p470) target = $region93
        $region92: #{gnn_forward.2} parent=84 // pred_region
          %473 = vst [vmem:[#allocation2] sm:$0xff] 0.0
          %474 = vst [vmem:[#allocation2 + $0x8] sm:$0xff] 0.0
          %475 = vst [vmem:[#allocation2 + $0x10] sm:$0xff] 0.0
          %476 = vst [vmem:[#allocation2 + $0x18] sm:$0xff] 0.0
          %477 = vst [vmem:[#allocation2 + $0x20] sm:$0xff] 0.0
          %478 = vst [vmem:[#allocation2 + $0x28] sm:$0xff] 0.0
          %479 = vst [vmem:[#allocation2 + $0x30] sm:$0xff] 0.0
          %480 = vst [vmem:[#allocation2 + $0x38] sm:$0xff] 0.0
          %481 = vst [vmem:[#allocation2 + $0x40] sm:$0xff] 0.0
          %482 = vst [vmem:[#allocation2 + $0x48] sm:$0xff] 0.0
          %483 = vst [vmem:[#allocation2 + $0x50] sm:$0xff] 0.0
          %484 = vst [vmem:[#allocation2 + $0x58] sm:$0xff] 0.0
          %485 = vst [vmem:[#allocation2 + $0x60] sm:$0xff] 0.0
          %486 = vst [vmem:[#allocation2 + $0x68] sm:$0xff] 0.0
          %487 = vst [vmem:[#allocation2 + $0x70] sm:$0xff] 0.0
          %488 = vst [vmem:[#allocation2 + $0x78] sm:$0xff] 0.0
        $region93: #{gnn_forward.2} parent=84 // pred_fallthru
          _
        %v489 = vld [vmem:[#allocation2] sm:$0xff]
        %v490 = vld [vmem:[#allocation2 + $0x8] sm:$0xff]
        %v491 = vld [vmem:[#allocation2 + $0x10] sm:$0xff]
        %v492 = vld [vmem:[#allocation2 + $0x18] sm:$0xff]
        %v493 = vld [vmem:[#allocation2 + $0x20] sm:$0xff]
        %v494 = vld [vmem:[#allocation2 + $0x28] sm:$0xff]
        %v495 = vld [vmem:[#allocation2 + $0x30] sm:$0xff]
        %v496 = vld [vmem:[#allocation2 + $0x38] sm:$0xff]
        %v497 = vld [vmem:[#allocation2 + $0x40] sm:$0xff]
        %v498 = vld [vmem:[#allocation2 + $0x48] sm:$0xff]
        %v499 = vld [vmem:[#allocation2 + $0x50] sm:$0xff]
        %v500 = vld [vmem:[#allocation2 + $0x58] sm:$0xff]
        %v501 = vld [vmem:[#allocation2 + $0x60] sm:$0xff]
        %v502 = vld [vmem:[#allocation2 + $0x68] sm:$0xff]
        %v503 = vld [vmem:[#allocation2 + $0x70] sm:$0xff]
        %v504 = vld [vmem:[#allocation2 + $0x78] sm:$0xff]
        %v505 = vld [vmem:[%s399] sm:$0xf]
        %v506 = vld [vmem:[%s399 + $0x4] sm:$0xf]
        %v507 = vld [vmem:[%s399 + $0x8] sm:$0xf]
        %v508 = vld [vmem:[%s399 + $0xc] sm:$0xf]
        %v509 = vld [vmem:[%s399 + $0x10] sm:$0xf]
        %v510 = vld [vmem:[%s399 + $0x14] sm:$0xf]
        %v511 = vld [vmem:[%s399 + $0x18] sm:$0xf]
        %v512 = vld [vmem:[%s399 + $0x1c] sm:$0xf]
        %v513 = vld [vmem:[%s399 + $0x20] sm:$0xf]
        %v514 = vld [vmem:[%s399 + $0x24] sm:$0xf]
        %v515 = vld [vmem:[%s399 + $0x28] sm:$0xf]
        %v516 = vld [vmem:[%s399 + $0x2c] sm:$0xf]
        %v517 = vld [vmem:[%s399 + $0x30] sm:$0xf]
        %v518 = vld [vmem:[%s399 + $0x34] sm:$0xf]
        %v519 = vld [vmem:[%s399 + $0x38] sm:$0xf]
        %v520 = vld [vmem:[%s399 + $0x3c] sm:$0xf]
        %v521 = vld [vmem:[%s448] sm:$0xf]
        %v522 = vld [vmem:[%s448 + $0x4] sm:$0xf]
        %v523 = vld [vmem:[%s448 + $0x8] sm:$0xf]
        %v524 = vld [vmem:[%s448 + $0xc] sm:$0xf]
        %v525 = vld [vmem:[%s448 + $0x10] sm:$0xf]
        %v526 = vld [vmem:[%s448 + $0x14] sm:$0xf]
        %v527 = vld [vmem:[%s448 + $0x18] sm:$0xf]
        %v528 = vld [vmem:[%s448 + $0x1c] sm:$0xf]
        %v529 = vld [vmem:[%s448 + $0x20] sm:$0xf]
        %v530 = vld [vmem:[%s448 + $0x24] sm:$0xf]
        %v531 = vld [vmem:[%s448 + $0x28] sm:$0xf]
        %v532 = vld [vmem:[%s448 + $0x2c] sm:$0xf]
        %v533 = vld [vmem:[%s448 + $0x30] sm:$0xf]
        %v534 = vld [vmem:[%s448 + $0x34] sm:$0xf]
        %v535 = vld [vmem:[%s448 + $0x38] sm:$0xf]
        %v536 = vld [vmem:[%s448 + $0x3c] sm:$0xf]
        %v553 = vunpack.c.l.b16 %v505
        %v554 = vunpack.c.l.b16 %v506
        %v555 = vunpack.c.l.b16 %v507
        %v556 = vunpack.c.l.b16 %v508
        %v557 = vunpack.c.l.b16 %v509
        %v558 = vunpack.c.l.b16 %v510
        %v559 = vunpack.c.l.b16 %v511
        %v560 = vunpack.c.l.b16 %v512
        %v561 = vunpack.c.l.b16 %v513
        %v562 = vunpack.c.l.b16 %v514
        %v563 = vunpack.c.l.b16 %v515
        %v564 = vunpack.c.l.b16 %v516
        %v565 = vunpack.c.l.b16 %v517
        %v566 = vunpack.c.l.b16 %v518
        %v567 = vunpack.c.l.b16 %v519
        %v568 = vunpack.c.l.b16 %v520
        %v569 = vpack.c.b16 %v554, %v553
        %v570 = vpack.c.b16 %v556, %v555
        %v571 = vpack.c.b16 %v558, %v557
        %v572 = vpack.c.b16 %v560, %v559
        %v573 = vpack.c.b16 %v562, %v561
        %v574 = vpack.c.b16 %v564, %v563
        %v575 = vpack.c.b16 %v566, %v565
        %v576 = vpack.c.b16 %v568, %v567
        %v601 = vunpack.c.l.b16 %v521
        %v602 = vunpack.c.l.b16 %v522
        %v603 = vunpack.c.l.b16 %v523
        %v604 = vunpack.c.l.b16 %v524
        %v605 = vunpack.c.l.b16 %v525
        %v606 = vunpack.c.l.b16 %v526
        %v607 = vunpack.c.l.b16 %v527
        %v608 = vunpack.c.l.b16 %v528
        %v609 = vunpack.c.l.b16 %v529
        %v610 = vunpack.c.l.b16 %v530
        %v611 = vunpack.c.l.b16 %v531
        %v612 = vunpack.c.l.b16 %v532
        %v613 = vunpack.c.l.b16 %v533
        %v614 = vunpack.c.l.b16 %v534
        %v615 = vunpack.c.l.b16 %v535
        %v616 = vunpack.c.l.b16 %v536
        %v617 = vpack.c.b16 %v602, %v601
        %v618 = vpack.c.b16 %v604, %v603
        %v619 = vpack.c.b16 %v606, %v605
        %v620 = vpack.c.b16 %v608, %v607
        %v621 = vpack.c.b16 %v610, %v609
        %v622 = vpack.c.b16 %v612, %v611
        %v623 = vpack.c.b16 %v614, %v613
        %v624 = vpack.c.b16 %v616, %v615
        %633 = vmatprep.subr.bf16.mxu0 0
        %634 = vmatpush1.bf16.msra.mxu0 %v624
        %635 = vmatprep.subr.bf16.mxu0 0
        %636 = vmatpush1.bf16.msra.mxu0 %v623
        %637 = vmatprep.subr.bf16.mxu0 0
        %638 = vmatpush1.bf16.msra.mxu0 %v622
        %639 = vmatprep.subr.bf16.mxu0 0
        %640 = vmatpush1.bf16.msra.mxu0 %v621
        %641 = vmatprep.subr.bf16.mxu0 0
        %642 = vmatpush1.bf16.msra.mxu0 %v620
        %643 = vmatprep.subr.bf16.mxu0 0
        %644 = vmatpush1.bf16.msra.mxu0 %v619
        %645 = vmatprep.subr.bf16.mxu0 0
        %646 = vmatpush1.bf16.msra.mxu0 %v618
        %647 = vmatprep.subr.bf16.mxu0 0
        %648 = vmatpush1.bf16.msra.mxu0 %v617
        %649 = vmatprep.subr.bf16.mxu0 0
        %650 = vmatpush2.bf16.msra.mxu0 0
        %651 = vmatprep.subr.bf16.mxu0 0
        %652 = vmatpush2.bf16.msra.mxu0 0
        %653 = vmatprep.subr.bf16.mxu0 0
        %654 = vmatpush2.bf16.msra.mxu0 0
        %655 = vmatprep.subr.bf16.mxu0 0
        %656 = vmatpush2.bf16.msra.mxu0 0
        %657 = vmatprep.subr.bf16.mxu0 0
        %658 = vmatpush2.bf16.msra.mxu0 0
        %659 = vmatprep.subr.bf16.mxu0 0
        %660 = vmatpush2.bf16.msra.mxu0 0
        %661 = vmatprep.subr.bf16.mxu0 0
        %662 = vmatpush2.bf16.msra.mxu0 0
        %663 = vmatprep.subr.bf16.mxu0 0
        %664 = vmatpush2.bf16.msra.mxu0 0
        %665 = vmatprep.mubr.bf16.mxu0 0
        %666 = vmatmul.mubr.bf16.gmra.mxu0 %v569
        %v667 = vpop.f32.mrf.mxu0
        %v668 = vadd.f32 0.0, %v667
        %v669 = vpop.f32.mrf.mxu0
        %v670 = vpop.f32.mrf.mxu0
        %v671 = vadd.f32 0.0, %v670
        %v672 = vpop.f32.mrf.mxu0
        %673 = vmatprep.mubr.bf16.mxu0 0
        %674 = vmatmul.mubr.bf16.gmra.mxu0 %v570
        %v675 = vpop.f32.mrf.mxu0
        %v676 = vadd.f32 0.0, %v675
        %v677 = vpop.f32.mrf.mxu0
        %v678 = vpop.f32.mrf.mxu0
        %v679 = vadd.f32 0.0, %v678
        %v680 = vpop.f32.mrf.mxu0
        %681 = vmatprep.mubr.bf16.mxu0 0
        %682 = vmatmul.mubr.bf16.gmra.mxu0 %v571
        %v683 = vpop.f32.mrf.mxu0
        %v684 = vadd.f32 0.0, %v683
        %v685 = vpop.f32.mrf.mxu0
        %v686 = vpop.f32.mrf.mxu0
        %v687 = vadd.f32 0.0, %v686
        %v688 = vpop.f32.mrf.mxu0
        %689 = vmatprep.mubr.bf16.mxu0 0
        %690 = vmatmul.mubr.bf16.gmra.mxu0 %v572
        %v691 = vpop.f32.mrf.mxu0
        %v692 = vadd.f32 0.0, %v691
        %v693 = vpop.f32.mrf.mxu0
        %v694 = vpop.f32.mrf.mxu0
        %v695 = vadd.f32 0.0, %v694
        %v696 = vpop.f32.mrf.mxu0
        %697 = vmatprep.mubr.bf16.mxu0 0
        %698 = vmatmul.mubr.bf16.gmra.mxu0 %v573
        %v699 = vpop.f32.mrf.mxu0
        %v700 = vadd.f32 0.0, %v699
        %v701 = vpop.f32.mrf.mxu0
        %v702 = vpop.f32.mrf.mxu0
        %v703 = vadd.f32 0.0, %v702
        %v704 = vpop.f32.mrf.mxu0
        %705 = vmatprep.mubr.bf16.mxu0 0
        %706 = vmatmul.mubr.bf16.gmra.mxu0 %v574
        %v707 = vpop.f32.mrf.mxu0
        %v708 = vadd.f32 0.0, %v707
        %v709 = vpop.f32.mrf.mxu0
        %v710 = vpop.f32.mrf.mxu0
        %v711 = vadd.f32 0.0, %v710
        %v712 = vpop.f32.mrf.mxu0
        %713 = vmatprep.mubr.bf16.mxu0 0
        %714 = vmatmul.mubr.bf16.gmra.mxu0 %v575
        %v715 = vpop.f32.mrf.mxu0
        %v716 = vadd.f32 0.0, %v715
        %v717 = vpop.f32.mrf.mxu0
        %v718 = vpop.f32.mrf.mxu0
        %v719 = vadd.f32 0.0, %v718
        %v720 = vpop.f32.mrf.mxu0
        %721 = vmatprep.mubr.bf16.mxu0 0
        %722 = vmatmul.mubr.bf16.gmra.mxu0 %v576
        %v723 = vpop.f32.mrf.mxu0
        %v724 = vadd.f32 0.0, %v723
        %v725 = vpop.f32.mrf.mxu0
        %v726 = vpop.f32.mrf.mxu0
        %v727 = vadd.f32 0.0, %v726
        %v728 = vpop.f32.mrf.mxu0
        %729 = vdwg.mxu0
        %v730 = vadd.f32 %v489, %v668
        %v731 = vadd.f32 %v490, %v671
        %v732 = vadd.f32 %v491, %v676
        %v733 = vadd.f32 %v492, %v679
        %v734 = vadd.f32 %v493, %v684
        %v735 = vadd.f32 %v494, %v687
        %v736 = vadd.f32 %v495, %v692
        %v737 = vadd.f32 %v496, %v695
        %v738 = vadd.f32 %v497, %v700
        %v739 = vadd.f32 %v498, %v703
        %v740 = vadd.f32 %v499, %v708
        %v741 = vadd.f32 %v500, %v711
        %v742 = vadd.f32 %v501, %v716
        %v743 = vadd.f32 %v502, %v719
        %v744 = vadd.f32 %v503, %v724
        %v745 = vadd.f32 %v504, %v727
        %746 = vst [vmem:[#allocation2] sm:$0xff] %v730
        %747 = vst [vmem:[#allocation2 + $0x8] sm:$0xff] %v731
        %748 = vst [vmem:[#allocation2 + $0x10] sm:$0xff] %v732
        %749 = vst [vmem:[#allocation2 + $0x18] sm:$0xff] %v733
        %750 = vst [vmem:[#allocation2 + $0x20] sm:$0xff] %v734
        %751 = vst [vmem:[#allocation2 + $0x28] sm:$0xff] %v735
        %752 = vst [vmem:[#allocation2 + $0x30] sm:$0xff] %v736
        %753 = vst [vmem:[#allocation2 + $0x38] sm:$0xff] %v737
        %754 = vst [vmem:[#allocation2 + $0x40] sm:$0xff] %v738
        %755 = vst [vmem:[#allocation2 + $0x48] sm:$0xff] %v739
        %756 = vst [vmem:[#allocation2 + $0x50] sm:$0xff] %v740
        %757 = vst [vmem:[#allocation2 + $0x58] sm:$0xff] %v741
        %758 = vst [vmem:[#allocation2 + $0x60] sm:$0xff] %v742
        %759 = vst [vmem:[#allocation2 + $0x68] sm:$0xff] %v743
        %760 = vst [vmem:[#allocation2 + $0x70] sm:$0xff] %v744
        %761 = vst [vmem:[#allocation2 + $0x78] sm:$0xff] %v745
        %p762 = scmp.eq.s32.totalorder %s24, 2
        // Predicated region
        $region94: #{gnn_forward.2} parent=84 // pred_check
          %p763 = pneg %p762
        $region95: #{gnn_forward.2} parent=84 // pred_check_branch
          %765 = sbr.rel (%p763) target = $region97
        $region96: #{gnn_forward.2} parent=84 // pred_region
          %s766 = sld [smem:[#allocation3]]
          %s767 = ssub.f32 %s766, 1.0
          %v768 = vld [vmem:[%s460] sm:$0xff]
          %v769 = vld [vmem:[%s460 + $0x8] sm:$0xff]
          %v770 = vld [vmem:[%s460 + $0x10] sm:$0xff]
          %v771 = vld [vmem:[%s460 + $0x18] sm:$0xff]
          %v772 = vld [vmem:[%s460 + $0x20] sm:$0xff]
          %v773 = vld [vmem:[%s460 + $0x28] sm:$0xff]
          %v774 = vld [vmem:[%s460 + $0x30] sm:$0xff]
          %v775 = vld [vmem:[%s460 + $0x38] sm:$0xff]
          %v776 = vld [vmem:[%s460 + $0x40] sm:$0xff]
          %v777 = vld [vmem:[%s460 + $0x48] sm:$0xff]
          %v778 = vld [vmem:[%s460 + $0x50] sm:$0xff]
          %v779 = vld [vmem:[%s460 + $0x58] sm:$0xff]
          %v780 = vld [vmem:[%s460 + $0x60] sm:$0xff]
          %v781 = vld [vmem:[%s460 + $0x68] sm:$0xff]
          %v782 = vld [vmem:[%s460 + $0x70] sm:$0xff]
          %v783 = vld [vmem:[%s460 + $0x78] sm:$0xff]
          %v784 = vstv %s767
          %v785 = vmul.f32 %v784, %v768
          %v786 = vmul.f32 %v784, %v769
          %v787 = vmul.f32 %v784, %v770
          %v788 = vmul.f32 %v784, %v771
          %v789 = vmul.f32 %v784, %v772
          %v790 = vmul.f32 %v784, %v773
          %v791 = vmul.f32 %v784, %v774
          %v792 = vmul.f32 %v784, %v775
          %v793 = vmul.f32 %v784, %v776
          %v794 = vmul.f32 %v784, %v777
          %v795 = vmul.f32 %v784, %v778
          %v796 = vmul.f32 %v784, %v779
          %v797 = vmul.f32 %v784, %v780
          %v798 = vmul.f32 %v784, %v781
          %v799 = vmul.f32 %v784, %v782
          %v800 = vmul.f32 %v784, %v783
          %v801 = vld [vmem:[%s454] sm:$0xff]
          %v802 = vld [vmem:[%s454 + $0x8] sm:$0xff]
          %v803 = vld [vmem:[%s454 + $0x10] sm:$0xff]
          %v804 = vld [vmem:[%s454 + $0x18] sm:$0xff]
          %v805 = vld [vmem:[%s454 + $0x20] sm:$0xff]
          %v806 = vld [vmem:[%s454 + $0x28] sm:$0xff]
          %v807 = vld [vmem:[%s454 + $0x30] sm:$0xff]
          %v808 = vld [vmem:[%s454 + $0x38] sm:$0xff]
          %v809 = vld [vmem:[%s454 + $0x40] sm:$0xff]
          %v810 = vld [vmem:[%s454 + $0x48] sm:$0xff]
          %v811 = vld [vmem:[%s454 + $0x50] sm:$0xff]
          %v812 = vld [vmem:[%s454 + $0x58] sm:$0xff]
          %v813 = vld [vmem:[%s454 + $0x60] sm:$0xff]
          %v814 = vld [vmem:[%s454 + $0x68] sm:$0xff]
          %v815 = vld [vmem:[%s454 + $0x70] sm:$0xff]
          %v816 = vld [vmem:[%s454 + $0x78] sm:$0xff]
          %818 = vset.pattern.permute.xlu0 0
          %819 = vperm.xlu0 %818, %v785
          %v820 = vpop.permute.xlu0 %819
          %823 = vset.pattern.permute.xlu0 0
          %824 = vperm.xlu0 %823, %v786
          %v825 = vpop.permute.xlu0 %824
          %828 = vset.pattern.permute.xlu0 0
          %829 = vperm.xlu0 %828, %v787
          %v830 = vpop.permute.xlu0 %829
          %833 = vset.pattern.permute.xlu0 0
          %834 = vperm.xlu0 %833, %v788
          %v835 = vpop.permute.xlu0 %834
          %838 = vset.pattern.permute.xlu0 0
          %839 = vperm.xlu0 %838, %v789
          %v840 = vpop.permute.xlu0 %839
          %843 = vset.pattern.permute.xlu0 0
          %844 = vperm.xlu0 %843, %v790
          %v845 = vpop.permute.xlu0 %844
          %848 = vset.pattern.permute.xlu0 0
          %849 = vperm.xlu0 %848, %v791
          %v850 = vpop.permute.xlu0 %849
          %853 = vset.pattern.permute.xlu0 0
          %854 = vperm.xlu0 %853, %v792
          %v855 = vpop.permute.xlu0 %854
          %858 = vset.pattern.permute.xlu0 0
          %859 = vperm.xlu0 %858, %v793
          %v860 = vpop.permute.xlu0 %859
          %863 = vset.pattern.permute.xlu0 0
          %864 = vperm.xlu0 %863, %v794
          %v865 = vpop.permute.xlu0 %864
          %868 = vset.pattern.permute.xlu0 0
          %869 = vperm.xlu0 %868, %v795
          %v870 = vpop.permute.xlu0 %869
          %873 = vset.pattern.permute.xlu0 0
          %874 = vperm.xlu0 %873, %v796
          %v875 = vpop.permute.xlu0 %874
          %878 = vset.pattern.permute.xlu0 0
          %879 = vperm.xlu0 %878, %v797
          %v880 = vpop.permute.xlu0 %879
          %883 = vset.pattern.permute.xlu0 0
          %884 = vperm.xlu0 %883, %v798
          %v885 = vpop.permute.xlu0 %884
          %888 = vset.pattern.permute.xlu0 0
          %889 = vperm.xlu0 %888, %v799
          %v890 = vpop.permute.xlu0 %889
          %893 = vset.pattern.permute.xlu0 0
          %894 = vperm.xlu0 %893, %v800
          %v895 = vpop.permute.xlu0 %894
          %v897 = vmul.f32 %v820, %v801
          %v898 = vmul.f32 %v825, %v802
          %v899 = vmul.f32 %v830, %v803
          %v900 = vmul.f32 %v835, %v804
          %v901 = vmul.f32 %v840, %v805
          %v902 = vmul.f32 %v845, %v806
          %v903 = vmul.f32 %v850, %v807
          %v904 = vmul.f32 %v855, %v808
          %v905 = vmul.f32 %v860, %v809
          %v906 = vmul.f32 %v865, %v810
          %v907 = vmul.f32 %v870, %v811
          %v908 = vmul.f32 %v875, %v812
          %v909 = vmul.f32 %v880, %v813
          %v910 = vmul.f32 %v885, %v814
          %v911 = vmul.f32 %v890, %v815
          %v912 = vmul.f32 %v895, %v816
          %v913 = vld [vmem:[#allocation2] sm:$0xff]
          %v914 = vld [vmem:[#allocation2 + $0x8] sm:$0xff]
          %v915 = vld [vmem:[#allocation2 + $0x10] sm:$0xff]
          %v916 = vld [vmem:[#allocation2 + $0x18] sm:$0xff]
          %v917 = vld [vmem:[#allocation2 + $0x20] sm:$0xff]
          %v918 = vld [vmem:[#allocation2 + $0x28] sm:$0xff]
          %v919 = vld [vmem:[#allocation2 + $0x30] sm:$0xff]
          %v920 = vld [vmem:[#allocation2 + $0x38] sm:$0xff]
          %v921 = vld [vmem:[#allocation2 + $0x40] sm:$0xff]
          %v922 = vld [vmem:[#allocation2 + $0x48] sm:$0xff]
          %v923 = vld [vmem:[#allocation2 + $0x50] sm:$0xff]
          %v924 = vld [vmem:[#allocation2 + $0x58] sm:$0xff]
          %v925 = vld [vmem:[#allocation2 + $0x60] sm:$0xff]
          %v926 = vld [vmem:[#allocation2 + $0x68] sm:$0xff]
          %v927 = vld [vmem:[#allocation2 + $0x70] sm:$0xff]
          %v928 = vld [vmem:[#allocation2 + $0x78] sm:$0xff]
          %v929 = vadd.f32 %v913, %v897
          %v930 = vadd.f32 %v914, %v898
          %v931 = vadd.f32 %v915, %v899
          %v932 = vadd.f32 %v916, %v900
          %v933 = vadd.f32 %v917, %v901
          %v934 = vadd.f32 %v918, %v902
          %v935 = vadd.f32 %v919, %v903
          %v936 = vadd.f32 %v920, %v904
          %v937 = vadd.f32 %v921, %v905
          %v938 = vadd.f32 %v922, %v906
          %v939 = vadd.f32 %v923, %v907
          %v940 = vadd.f32 %v924, %v908
          %v941 = vadd.f32 %v925, %v909
          %v942 = vadd.f32 %v926, %v910
          %v943 = vadd.f32 %v927, %v911
          %v944 = vadd.f32 %v928, %v912
          %v945 = vld [vmem:[%s4] sm:$0x1]
          %v947 = vlaneseq
          %v948 = vshrl.u32 %v947, 7
          %v949 = vsub.s32 0, %v948
          %v950 = vrot.slane %v945, %v949
          %v952 = vadd.f32 %v929, %v950
          %v953 = vadd.f32 %v930, %v950
          %v954 = vadd.f32 %v931, %v950
          %v955 = vadd.f32 %v932, %v950
          %v956 = vadd.f32 %v933, %v950
          %v957 = vadd.f32 %v934, %v950
          %v958 = vadd.f32 %v935, %v950
          %v959 = vadd.f32 %v936, %v950
          %v960 = vadd.f32 %v937, %v950
          %v961 = vadd.f32 %v938, %v950
          %v962 = vadd.f32 %v939, %v950
          %v963 = vadd.f32 %v940, %v950
          %v964 = vadd.f32 %v941, %v950
          %v965 = vadd.f32 %v942, %v950
          %v966 = vadd.f32 %v943, %v950
          %v967 = vadd.f32 %v944, %v950
          %v968 = vmax.f32 %v952, 0.0
          %v969 = vmax.f32 %v953, 0.0
          %v970 = vmax.f32 %v954, 0.0
          %v971 = vmax.f32 %v955, 0.0
          %v972 = vmax.f32 %v956, 0.0
          %v973 = vmax.f32 %v957, 0.0
          %v974 = vmax.f32 %v958, 0.0
          %v975 = vmax.f32 %v959, 0.0
          %v976 = vmax.f32 %v960, 0.0
          %v977 = vmax.f32 %v961, 0.0
          %v978 = vmax.f32 %v962, 0.0
          %v979 = vmax.f32 %v963, 0.0
          %v980 = vmax.f32 %v964, 0.0
          %v981 = vmax.f32 %v965, 0.0
          %v982 = vmax.f32 %v966, 0.0
          %v983 = vmax.f32 %v967, 0.0
          %v984 = vpack.c.bf16 %v969, %v968
          %v985 = vpack.c.bf16 %v971, %v970
          %v986 = vpack.c.bf16 %v973, %v972
          %v987 = vpack.c.bf16 %v975, %v974
          %v988 = vpack.c.bf16 %v977, %v976
          %v989 = vpack.c.bf16 %v979, %v978
          %v990 = vpack.c.bf16 %v981, %v980
          %v991 = vpack.c.bf16 %v983, %v982
          %v992 = vld [vmem:[%s6] sm:$0xf]
          %v993 = vld [vmem:[%s6 + $0x4] sm:$0xf]
          %v994 = vld [vmem:[%s6 + $0x8] sm:$0xf]
          %v995 = vld [vmem:[%s6 + $0xc] sm:$0xf]
          %v996 = vld [vmem:[%s6 + $0x10] sm:$0xf]
          %v997 = vld [vmem:[%s6 + $0x14] sm:$0xf]
          %v998 = vld [vmem:[%s6 + $0x18] sm:$0xf]
          %v999 = vld [vmem:[%s6 + $0x1c] sm:$0xf]
          %v1000 = vld [vmem:[%s6 + $0x20] sm:$0xf]
          %v1001 = vld [vmem:[%s6 + $0x24] sm:$0xf]
          %v1002 = vld [vmem:[%s6 + $0x28] sm:$0xf]
          %v1003 = vld [vmem:[%s6 + $0x2c] sm:$0xf]
          %v1004 = vld [vmem:[%s6 + $0x30] sm:$0xf]
          %v1005 = vld [vmem:[%s6 + $0x34] sm:$0xf]
          %v1006 = vld [vmem:[%s6 + $0x38] sm:$0xf]
          %v1007 = vld [vmem:[%s6 + $0x3c] sm:$0xf]
          %v1024 = vunpack.c.l.b16 %v992
          %v1025 = vunpack.c.l.b16 %v993
          %v1026 = vunpack.c.l.b16 %v994
          %v1027 = vunpack.c.l.b16 %v995
          %v1028 = vunpack.c.l.b16 %v996
          %v1029 = vunpack.c.l.b16 %v997
          %v1030 = vunpack.c.l.b16 %v998
          %v1031 = vunpack.c.l.b16 %v999
          %v1032 = vunpack.c.l.b16 %v1000
          %v1033 = vunpack.c.l.b16 %v1001
          %v1034 = vunpack.c.l.b16 %v1002
          %v1035 = vunpack.c.l.b16 %v1003
          %v1036 = vunpack.c.l.b16 %v1004
          %v1037 = vunpack.c.l.b16 %v1005
          %v1038 = vunpack.c.l.b16 %v1006
          %v1039 = vunpack.c.l.b16 %v1007
          %v1040 = vpack.c.b16 %v1025, %v1024
          %v1041 = vpack.c.b16 %v1027, %v1026
          %v1042 = vpack.c.b16 %v1029, %v1028
          %v1043 = vpack.c.b16 %v1031, %v1030
          %v1044 = vpack.c.b16 %v1033, %v1032
          %v1045 = vpack.c.b16 %v1035, %v1034
          %v1046 = vpack.c.b16 %v1037, %v1036
          %v1047 = vpack.c.b16 %v1039, %v1038
          %1056 = vmatprep.subr.bf16.mxu0 0
          %1057 = vmatpush1.bf16.msra.mxu0 %v1047
          %1058 = vmatprep.subr.bf16.mxu0 0
          %1059 = vmatpush1.bf16.msra.mxu0 %v1046
          %1060 = vmatprep.subr.bf16.mxu0 0
          %1061 = vmatpush1.bf16.msra.mxu0 %v1045
          %1062 = vmatprep.subr.bf16.mxu0 0
          %1063 = vmatpush1.bf16.msra.mxu0 %v1044
          %1064 = vmatprep.subr.bf16.mxu0 0
          %1065 = vmatpush1.bf16.msra.mxu0 %v1043
          %1066 = vmatprep.subr.bf16.mxu0 0
          %1067 = vmatpush1.bf16.msra.mxu0 %v1042
          %1068 = vmatprep.subr.bf16.mxu0 0
          %1069 = vmatpush1.bf16.msra.mxu0 %v1041
          %1070 = vmatprep.subr.bf16.mxu0 0
          %1071 = vmatpush1.bf16.msra.mxu0 %v1040
          %1072 = vmatprep.subr.bf16.mxu0 0
          %1073 = vmatpush2.bf16.msra.mxu0 0
          %1074 = vmatprep.subr.bf16.mxu0 0
          %1075 = vmatpush2.bf16.msra.mxu0 0
          %1076 = vmatprep.subr.bf16.mxu0 0
          %1077 = vmatpush2.bf16.msra.mxu0 0
          %1078 = vmatprep.subr.bf16.mxu0 0
          %1079 = vmatpush2.bf16.msra.mxu0 0
          %1080 = vmatprep.subr.bf16.mxu0 0
          %1081 = vmatpush2.bf16.msra.mxu0 0
          %1082 = vmatprep.subr.bf16.mxu0 0
          %1083 = vmatpush2.bf16.msra.mxu0 0
          %1084 = vmatprep.subr.bf16.mxu0 0
          %1085 = vmatpush2.bf16.msra.mxu0 0
          %1086 = vmatprep.subr.bf16.mxu0 0
          %1087 = vmatpush2.bf16.msra.mxu0 0
          %1088 = vmatprep.mubr.bf16.mxu0 0
          %1089 = vmatmul.mubr.bf16.gmra.mxu0 %v984
          %v1090 = vpop.f32.mrf.mxu0
          %v1091 = vadd.f32 0.0, %v1090
          %v1092 = vpop.f32.mrf.mxu0
          %v1093 = vpop.f32.mrf.mxu0
          %v1094 = vadd.f32 0.0, %v1093
          %v1095 = vpop.f32.mrf.mxu0
          %1096 = vmatprep.mubr.bf16.mxu0 0
          %1097 = vmatmul.mubr.bf16.gmra.mxu0 %v985
          %v1098 = vpop.f32.mrf.mxu0
          %v1099 = vadd.f32 0.0, %v1098
          %v1100 = vpop.f32.mrf.mxu0
          %v1101 = vpop.f32.mrf.mxu0
          %v1102 = vadd.f32 0.0, %v1101
          %v1103 = vpop.f32.mrf.mxu0
          %1104 = vmatprep.mubr.bf16.mxu0 0
          %1105 = vmatmul.mubr.bf16.gmra.mxu0 %v986
          %v1106 = vpop.f32.mrf.mxu0
          %v1107 = vadd.f32 0.0, %v1106
          %v1108 = vpop.f32.mrf.mxu0
          %v1109 = vpop.f32.mrf.mxu0
          %v1110 = vadd.f32 0.0, %v1109
          %v1111 = vpop.f32.mrf.mxu0
          %1112 = vmatprep.mubr.bf16.mxu0 0
          %1113 = vmatmul.mubr.bf16.gmra.mxu0 %v987
          %v1114 = vpop.f32.mrf.mxu0
          %v1115 = vadd.f32 0.0, %v1114
          %v1116 = vpop.f32.mrf.mxu0
          %v1117 = vpop.f32.mrf.mxu0
          %v1118 = vadd.f32 0.0, %v1117
          %v1119 = vpop.f32.mrf.mxu0
          %1120 = vmatprep.mubr.bf16.mxu0 0
          %1121 = vmatmul.mubr.bf16.gmra.mxu0 %v988
          %v1122 = vpop.f32.mrf.mxu0
          %v1123 = vadd.f32 0.0, %v1122
          %v1124 = vpop.f32.mrf.mxu0
          %v1125 = vpop.f32.mrf.mxu0
          %v1126 = vadd.f32 0.0, %v1125
          %v1127 = vpop.f32.mrf.mxu0
          %1128 = vmatprep.mubr.bf16.mxu0 0
          %1129 = vmatmul.mubr.bf16.gmra.mxu0 %v989
          %v1130 = vpop.f32.mrf.mxu0
          %v1131 = vadd.f32 0.0, %v1130
          %v1132 = vpop.f32.mrf.mxu0
          %v1133 = vpop.f32.mrf.mxu0
          %v1134 = vadd.f32 0.0, %v1133
          %v1135 = vpop.f32.mrf.mxu0
          %1136 = vmatprep.mubr.bf16.mxu0 0
          %1137 = vmatmul.mubr.bf16.gmra.mxu0 %v990
          %v1138 = vpop.f32.mrf.mxu0
          %v1139 = vadd.f32 0.0, %v1138
          %v1140 = vpop.f32.mrf.mxu0
          %v1141 = vpop.f32.mrf.mxu0
          %v1142 = vadd.f32 0.0, %v1141
          %v1143 = vpop.f32.mrf.mxu0
          %1144 = vmatprep.mubr.bf16.mxu0 0
          %1145 = vmatmul.mubr.bf16.gmra.mxu0 %v991
          %v1146 = vpop.f32.mrf.mxu0
          %v1147 = vadd.f32 0.0, %v1146
          %v1148 = vpop.f32.mrf.mxu0
          %v1149 = vpop.f32.mrf.mxu0
          %v1150 = vadd.f32 0.0, %v1149
          %v1151 = vpop.f32.mrf.mxu0
          %1152 = vdwg.mxu0
          %1153 = vst [vmem:[%s466] sm:$0xff] %v1091
          %1154 = vst [vmem:[%s466 + $0x8] sm:$0xff] %v1094
          %1155 = vst [vmem:[%s466 + $0x10] sm:$0xff] %v1099
          %1156 = vst [vmem:[%s466 + $0x18] sm:$0xff] %v1102
          %1157 = vst [vmem:[%s466 + $0x20] sm:$0xff] %v1107
          %1158 = vst [vmem:[%s466 + $0x28] sm:$0xff] %v1110
          %1159 = vst [vmem:[%s466 + $0x30] sm:$0xff] %v1115
          %1160 = vst [vmem:[%s466 + $0x38] sm:$0xff] %v1118
          %1161 = vst [vmem:[%s466 + $0x40] sm:$0xff] %v1123
          %1162 = vst [vmem:[%s466 + $0x48] sm:$0xff] %v1126
          %1163 = vst [vmem:[%s466 + $0x50] sm:$0xff] %v1131
          %1164 = vst [vmem:[%s466 + $0x58] sm:$0xff] %v1134
          %1165 = vst [vmem:[%s466 + $0x60] sm:$0xff] %v1139
          %1166 = vst [vmem:[%s466 + $0x68] sm:$0xff] %v1142
          %1167 = vst [vmem:[%s466 + $0x70] sm:$0xff] %v1147
          %1168 = vst [vmem:[%s466 + $0x78] sm:$0xff] %v1150
        $region97: #{gnn_forward.2} parent=84 // pred_fallthru
          _
        %s1169 = smul.u32 16, %s23
        %p1170 = scmp.lt.s32.totalorder %s1169, 47
        %s1171 = scalar_select %p1170, %s1169, 47
        %s1172 = smul.addr %s1171, 8
        %s1173 = scalar_lea.vmem %s7, %s1172
        // Predicated region
        $region98: #{gnn_forward.2} parent=84 // pred_check
          %p1174 = pneg %p218
        $region99: #{gnn_forward.2} parent=84 // pred_check_branch
          %1176 = sbr.rel (%p1174) target = $region101
        $region100: #{gnn_forward.2} parent=84 // pred_region
          %s1177 = smul.u32 16, %s23
        $region101: #{gnn_forward.2} parent=84 // pred_fallthru
          _
      $region85: #{gnn_forward.2} parent=5 // pred_fallthru
        _
      %p1178 = scmp.le.s32.totalorder 2, %s14
      // Predicated region
      $region102: #{gnn_forward.2} parent=5 // pred_check
        %p1179 = pneg %p1178
      $region103: #{gnn_forward.2} parent=5 // pred_check_branch
        %1181 = sbr.rel (%p1179) target = $region105
      $region104: #{gnn_forward.2} parent=5 // pred_region
        %s1182 = ssub.s32 %s14, 2
        // Predicated region
        $region106: #{gnn_forward.2} parent=104 // pred_check
          %p1183 = pneg %p224
        $region107: #{gnn_forward.2} parent=104 // pred_check_branch
          %1185 = sbr.rel (%p1183) target = $region109
        $region108: #{gnn_forward.2} parent=104 // pred_region
          %s1186 = smul.u32 16, %s25
          %p1187 = scmp.lt.s32.totalorder %s1186, 47
          %s1188 = scalar_select %p1187, %s1186, 47
          %s1189 = smul.addr %s1188, 8
          %s1190 = scalar_lea.vmem %s7, %s1189
        $region109: #{gnn_forward.2} parent=104 // pred_fallthru
          _
      $region105: #{gnn_forward.2} parent=5 // pred_fallthru
        _
    $region6: #{gnn_forward.2} parent=1 // loop_footer
      %s18 = sadd.s32 1, %s14
    $region7: #{gnn_forward.2} parent=1 // loop_footer_branch
      %13 = sbr.rel target = $region3
    $region8: #{gnn_forward.2} parent=1 // loop_exit
      _

// kernel: gnn_forward.3
$region0: #{gnn_forward.3}
  #allocation0 [shape = 'u32[]', space=smem, size = 0x4, offset = 0x4, fixed_abs, tag = 'smem constant byte address 0x4 - core index']
  #allocation1 [shape = 'u32[144,128]{1,0:T(1,128)}', space=vmem, size = 0x12000, scoped, tag = 'internal scratch']
  #allocation2 [shape = 'f32[128,128]{1,0:T(8,128)}', space=vmem, size = 0x10000, scoped, tag = 'scratch operand']
  #allocation3 [shape = 'f32[1]{0:T(128)S(6)}', space=smem, size = 0x200, scoped, tag = 'scoped memory for gnn_forward.3']
  %s0 = inlined_call_operand.vmem [shape: bf16[384,384], index: 0, kind: input, shape index: {}]
  %s1 = inlined_call_operand.vmem [shape: bf16[384,128], index: 1, kind: input, shape index: {}]
  %s2 = inlined_call_operand.vmem [shape: f32[384,128], index: 2, kind: input, shape index: {}]
  %s3 = inlined_call_operand.vmem [shape: f32[384,1], index: 3, kind: input, shape index: {}]
  %s4 = inlined_call_operand.vmem [shape: f32[1,128], index: 4, kind: input, shape index: {}]
  %s5 = inlined_call_operand.<no memory space> [shape: f32[1], index: 5, kind: input, shape index: {}]
  %s6 = inlined_call_operand.vmem [shape: f32[384,128], index: 6, kind: output, shape index: {}]
  %s7 = sld [smem:[#allocation0]]
  $region106: #{gnn_forward.3} parent=0
    _
  %s9 = ssub.s32 1, %s7
  %s10 = scalar_select 0, %s9, %s7
  %11 = sst [smem:[#allocation3]] %s5
  $region1: #{gnn_forward.3} parent=0
    #allocation4 [shape = 'u8[65536]{0}', space=vmem, size = 0x10000, scoped, tag = 'input window, operand 0']
    loop: start=0, step=1, limit=11
    $region2: #{gnn_forward.3} parent=1 // loop_pre_header
      _
    $region3: #{gnn_forward.3} parent=1 // loop_header
      %s13 = sphi 0, %s17
      %p14 = scmp.ge.s32.totalorder %s13, 11
      %s20 = sphi 0, %s32
      %s21 = sphi 0, %s28
      %s22 = sphi 0, %s20
      %s23 = sphi 0, %s21
      %s24 = sphi 0, %s22
      %s25 = sphi 0, %s23
      %s37 = sphi 0, %s39
      %s40 = sphi 0, %s37
      %s41 = sphi 0, %s40
      %s57 = sphi 0, %s41
      %s63 = sphi 0, %s65
      %s66 = sphi 0, %s63
      %s67 = sphi 0, %s66
      %s83 = sphi 0, %s67
      %s89 = sphi 0, %s91
      %s92 = sphi 0, %s89
      %s93 = sphi 0, %s92
      %s109 = sphi 0, %s93
      %s115 = sphi 0, %s117
      %s118 = sphi 0, %s115
      %s119 = sphi 0, %s118
      %s135 = sphi 0, %s119
      %s139 = sphi 0, %s139
      %s141 = sphi 0, %s139
      %s142 = sphi 0, %s141
      %s156 = sphi 0, %s142
      %s160 = sphi 0, %s160
      %s162 = sphi 0, %s160
      %s163 = sphi 0, %s162
      %s177 = sphi 0, %s163
      %s183 = sphi 0, %s185
      %s186 = sphi 0, %s183
      %s187 = sphi 0, %s186
      %s203 = sphi 0, %s187
    $region4: #{gnn_forward.3} parent=1 // loop_header_branch
      %16 = sbr.rel (%p14) target = $region8
    $region5: #{gnn_forward.3} parent=1 // loop_body
      %s18 = ssub.s32 %s13, 1
      %s19 = ssub.s32 %s13, 2
      %s26 = sadd.s32 1, %s21
      %p27 = scmp.ge.s32.totalorder %s26, 3
      %s28 = scalar_select %p27, 0, %s26
      %s29 = sadd.s32 1, %s20
      %s30 = scalar_select %p27, %s29, %s20
      %p31 = scmp.ge.s32.totalorder %s30, 3
      %s32 = scalar_select %p31, 0, %s30
      %s33 = ssub.s32 %s20, %s32
      %s34 = ssub.s32 %s21, %s28
      %s35 = sor.u32 %s33, %s34
      %p36 = scmp.eq.s32.totalorder %s35, 0
      %s38 = sadd.s32 %s37, 1
      %s39 = scalar_select %p36, %s37, %s38
      %p42 = pneg %p36
      %p43 = scmp.eq.s32.totalorder %s13, 8
      %p44 = por %p42, %p43
      %p45 = scmp.ne.s32.totalorder %s37, %s40
      %p46 = scmp.eq.s32.totalorder %s13, 0
      %p47 = por %p45, %p46
      %p48 = scmp.ne.s32.totalorder %s37, %s40
      %p49 = scmp.eq.s32.totalorder %s18, 8
      %p50 = por %p48, %p49
      %p51 = scmp.ne.s32.totalorder %s40, %s41
      %p52 = scmp.eq.s32.totalorder %s18, 0
      %p53 = por %p51, %p52
      %p54 = scmp.ne.s32.totalorder %s40, %s41
      %p55 = scmp.eq.s32.totalorder %s19, 8
      %p56 = por %p54, %p55
      %p58 = scmp.ne.s32.totalorder %s41, %s57
      %p59 = scmp.eq.s32.totalorder %s19, 0
      %p60 = por %p58, %p59
      %s61 = ssub.s32 %s21, %s28
      %p62 = scmp.eq.s32.totalorder %s61, 0
      %s64 = sadd.s32 %s63, 1
      %s65 = scalar_select %p62, %s63, %s64
      %p68 = pneg %p62
      %p69 = scmp.eq.s32.totalorder %s13, 8
      %p70 = por %p68, %p69
      %p71 = scmp.ne.s32.totalorder %s63, %s66
      %p72 = scmp.eq.s32.totalorder %s13, 0
      %p73 = por %p71, %p72
      %p74 = scmp.ne.s32.totalorder %s63, %s66
      %p75 = scmp.eq.s32.totalorder %s18, 8
      %p76 = por %p74, %p75
      %p77 = scmp.ne.s32.totalorder %s66, %s67
      %p78 = scmp.eq.s32.totalorder %s18, 0
      %p79 = por %p77, %p78
      %p80 = scmp.ne.s32.totalorder %s66, %s67
      %p81 = scmp.eq.s32.totalorder %s19, 8
      %p82 = por %p80, %p81
      %p84 = scmp.ne.s32.totalorder %s67, %s83
      %p85 = scmp.eq.s32.totalorder %s19, 0
      %p86 = por %p84, %p85
      %s87 = ssub.s32 %s20, %s32
      %p88 = scmp.eq.s32.totalorder %s87, 0
      %s90 = sadd.s32 %s89, 1
      %s91 = scalar_select %p88, %s89, %s90
      %p94 = pneg %p88
      %p95 = scmp.eq.s32.totalorder %s13, 8
      %p96 = por %p94, %p95
      %p97 = scmp.ne.s32.totalorder %s89, %s92
      %p98 = scmp.eq.s32.totalorder %s13, 0
      %p99 = por %p97, %p98
      %p100 = scmp.ne.s32.totalorder %s89, %s92
      %p101 = scmp.eq.s32.totalorder %s18, 8
      %p102 = por %p100, %p101
      %p103 = scmp.ne.s32.totalorder %s92, %s93
      %p104 = scmp.eq.s32.totalorder %s18, 0
      %p105 = por %p103, %p104
      %p106 = scmp.ne.s32.totalorder %s92, %s93
      %p107 = scmp.eq.s32.totalorder %s19, 8
      %p108 = por %p106, %p107
      %p110 = scmp.ne.s32.totalorder %s93, %s109
      %p111 = scmp.eq.s32.totalorder %s19, 0
      %p112 = por %p110, %p111
      %s113 = ssub.s32 %s20, %s32
      %p114 = scmp.eq.s32.totalorder %s113, 0
      %s116 = sadd.s32 %s115, 1
      %s117 = scalar_select %p114, %s115, %s116
      %p120 = pneg %p114
      %p121 = scmp.eq.s32.totalorder %s13, 8
      %p122 = por %p120, %p121
      %p123 = scmp.ne.s32.totalorder %s115, %s118
      %p124 = scmp.eq.s32.totalorder %s13, 0
      %p125 = por %p123, %p124
      %p126 = scmp.ne.s32.totalorder %s115, %s118
      %p127 = scmp.eq.s32.totalorder %s18, 8
      %p128 = por %p126, %p127
      %p129 = scmp.ne.s32.totalorder %s118, %s119
      %p130 = scmp.eq.s32.totalorder %s18, 0
      %p131 = por %p129, %p130
      %p132 = scmp.ne.s32.totalorder %s118, %s119
      %p133 = scmp.eq.s32.totalorder %s19, 8
      %p134 = por %p132, %p133
      %p136 = scmp.ne.s32.totalorder %s119, %s135
      %p137 = scmp.eq.s32.totalorder %s19, 0
      %p138 = por %p136, %p137
      %s140 = sadd.s32 %s139, 1
      %p143 = scmp.eq.s32.totalorder %s13, 8
      %p144 = scmp.ne.s32.totalorder %s139, %s141
      %p145 = scmp.eq.s32.totalorder %s13, 0
      %p146 = por %p144, %p145
      %p147 = scmp.ne.s32.totalorder %s139, %s141
      %p148 = scmp.eq.s32.totalorder %s18, 8
      %p149 = por %p147, %p148
      %p150 = scmp.ne.s32.totalorder %s141, %s142
      %p151 = scmp.eq.s32.totalorder %s18, 0
      %p152 = por %p150, %p151
      %p153 = scmp.ne.s32.totalorder %s141, %s142
      %p154 = scmp.eq.s32.totalorder %s19, 8
      %p155 = por %p153, %p154
      %p157 = scmp.ne.s32.totalorder %s142, %s156
      %p158 = scmp.eq.s32.totalorder %s19, 0
      %p159 = por %p157, %p158
      %s161 = sadd.s32 %s160, 1
      %p164 = scmp.eq.s32.totalorder %s13, 8
      %p165 = scmp.ne.s32.totalorder %s160, %s162
      %p166 = scmp.eq.s32.totalorder %s13, 0
      %p167 = por %p165, %p166
      %p168 = scmp.ne.s32.totalorder %s160, %s162
      %p169 = scmp.eq.s32.totalorder %s18, 8
      %p170 = por %p168, %p169
      %p171 = scmp.ne.s32.totalorder %s162, %s163
      %p172 = scmp.eq.s32.totalorder %s18, 0
      %p173 = por %p171, %p172
      %p174 = scmp.ne.s32.totalorder %s162, %s163
      %p175 = scmp.eq.s32.totalorder %s19, 8
      %p176 = por %p174, %p175
      %p178 = scmp.ne.s32.totalorder %s163, %s177
      %p179 = scmp.eq.s32.totalorder %s19, 0
      %p180 = por %p178, %p179
      %s181 = ssub.s32 %s20, %s32
      %p182 = scmp.eq.s32.totalorder %s181, 0
      %s184 = sadd.s32 %s183, 1
      %s185 = scalar_select %p182, %s183, %s184
      %p188 = pneg %p182
      %p189 = scmp.eq.s32.totalorder %s13, 8
      %p190 = por %p188, %p189
      %p191 = scmp.ne.s32.totalorder %s183, %s186
      %p192 = scmp.eq.s32.totalorder %s13, 0
      %p193 = por %p191, %p192
      %p194 = scmp.ne.s32.totalorder %s183, %s186
      %p195 = scmp.eq.s32.totalorder %s18, 8
      %p196 = por %p194, %p195
      %p197 = scmp.ne.s32.totalorder %s186, %s187
      %p198 = scmp.eq.s32.totalorder %s18, 0
      %p199 = por %p197, %p198
      %p200 = scmp.ne.s32.totalorder %s186, %s187
      %p201 = scmp.eq.s32.totalorder %s19, 8
      %p202 = por %p200, %p201
      %p204 = scmp.ne.s32.totalorder %s187, %s203
      %p205 = scmp.eq.s32.totalorder %s19, 0
      %p206 = por %p204, %p205
      %p207 = scmp.le.s32.totalorder 1, %s13
      %p208 = scmp.lt.s32.totalorder %s13, 10
      %p209 = pnand %p207, %p208
      %p210 = pneg %p209
      // Predicated region
      $region9: #{gnn_forward.3} parent=5 // pred_check
        _
      $region10: #{gnn_forward.3} parent=5 // pred_check_branch
        %212 = sbr.rel (%p209) target = $region12
      $region11: #{gnn_forward.3} parent=5 // pred_region
        %s213 = ssub.s32 %s13, 1
        // Predicated region
        $region13: #{gnn_forward.3} parent=11 // pred_check
          %p214 = pneg %p152
        $region14: #{gnn_forward.3} parent=11 // pred_check_branch
          %216 = sbr.rel (%p214) target = $region16
        $region15: #{gnn_forward.3} parent=11 // pred_region
          _
        $region16: #{gnn_forward.3} parent=11 // pred_fallthru
          _
        // Predicated region
        $region17: #{gnn_forward.3} parent=11 // pred_check
          %p217 = pneg %p173
        $region18: #{gnn_forward.3} parent=11 // pred_check_branch
          %219 = sbr.rel (%p217) target = $region20
        $region19: #{gnn_forward.3} parent=11 // pred_region
          _
        $region20: #{gnn_forward.3} parent=11 // pred_fallthru
          _
      $region12: #{gnn_forward.3} parent=5 // pred_fallthru
        _
      %p220 = scmp.lt.s32.totalorder %s13, 9
      // Predicated region
      $region21: #{gnn_forward.3} parent=5 // pred_check
        %p221 = pneg %p220
      $region22: #{gnn_forward.3} parent=5 // pred_check_branch
        %223 = sbr.rel (%p221) target = $region24
      $region23: #{gnn_forward.3} parent=5 // pred_region
        // Predicated region
        $region25: #{gnn_forward.3} parent=23 // pred_check
          %p224 = pneg %p47
        $region26: #{gnn_forward.3} parent=23 // pred_check_branch
          %226 = sbr.rel (%p224) target = $region28
        $region27: #{gnn_forward.3} parent=23 // pred_region
          %s227 = sand.u32 %s37, 1
          %s228 = sand.u32 %s37, 1
          %s229 = smul.addr %s228, 64
          %s230 = scalar_lea.vmem [#allocation4], %s229
          %s231 = smul.u32 16, %s20
          %s232 = smul.addr %s231, 3
          %s233 = sadd.s32 %s21, %s232
          %s234 = smul.addr %s233, 4
          %s235 = scalar_lea.vmem %s0, %s234
          // Predicated region
          $region29: #{gnn_forward.3} parent=27 // pred_check
            _
          $region30: #{gnn_forward.3} parent=27 // pred_check_branch
            %237 = sbr.rel (0) target = $region32
          $region31: #{gnn_forward.3} parent=27 // pred_region
            // Predicated region
            $region33: #{gnn_forward.3} parent=31 // pred_check
              _
            $region34: #{gnn_forward.3} parent=31 // pred_check_branch
              %239 = sbr.rel target = $region36
            $region35: #{gnn_forward.3} parent=31 // pred_region
              // Predicated region
              $region48: #{gnn_forward.3} parent=35 // pred_check
                _
              $region49: #{gnn_forward.3} parent=35 // pred_check_branch
                %285 = sbr.rel (0) target = $region51
              $region50: #{gnn_forward.3} parent=35 // pred_region
                loop: start=0, step=1, limit=1
                $region52: #{gnn_forward.3} parent=50 // loop_pre_header
                  _
                $region53: #{gnn_forward.3} parent=50 // loop_header
                  %s287 = sphi 0, %s291
                  %p288 = scmp.ge.s32.totalorder %s287, 1
                  %s292 = sphi %s235, %s235
                  %s293 = sphi %s230, %s230
                $region54: #{gnn_forward.3} parent=50 // loop_header_branch
                  %290 = sbr.rel (%p288) target = $region58
                $region55: #{gnn_forward.3} parent=50 // loop_body
                  _
                $region56: #{gnn_forward.3} parent=50 // loop_footer
                  %s291 = sadd.s32 1, %s287
                $region57: #{gnn_forward.3} parent=50 // loop_footer_branch
                  %286 = sbr.rel target = $region53
                $region58: #{gnn_forward.3} parent=50 // loop_exit
                  _
                %s295 = ssub.s32 16, 1
                loop: start=0, step=1, limit=1
                $region59: #{gnn_forward.3} parent=50 // loop_pre_header
                  _
                $region60: #{gnn_forward.3} parent=50 // loop_header
                  %s297 = sphi 0, %s301
                  %p298 = scmp.ge.s32.totalorder %s297, 1
                  %s302 = sphi %s235, %s235
                  %s303 = sphi %s230, %s230
                $region61: #{gnn_forward.3} parent=50 // loop_header_branch
                  %300 = sbr.rel (%p298) target = $region65
                $region62: #{gnn_forward.3} parent=50 // loop_body
                  %v304 = vld [vmem:[%s302] sm:%s295]
                  %305 = vst [vmem:[%s303] sm:%s295] %v304
                  %v306 = vld [vmem:[%s302 + $0xc] sm:%s295]
                  %307 = vst [vmem:[%s303 + $0x4] sm:%s295] %v306
                  %v308 = vld [vmem:[%s302 + $0x18] sm:%s295]
                  %309 = vst [vmem:[%s303 + $0x8] sm:%s295] %v308
                  %v310 = vld [vmem:[%s302 + $0x24] sm:%s295]
                  %311 = vst [vmem:[%s303 + $0xc] sm:%s295] %v310
                  %v312 = vld [vmem:[%s302 + $0x30] sm:%s295]
                  %313 = vst [vmem:[%s303 + $0x10] sm:%s295] %v312
                  %v314 = vld [vmem:[%s302 + $0x3c] sm:%s295]
                  %315 = vst [vmem:[%s303 + $0x14] sm:%s295] %v314
                  %v316 = vld [vmem:[%s302 + $0x48] sm:%s295]
                  %317 = vst [vmem:[%s303 + $0x18] sm:%s295] %v316
                  %v318 = vld [vmem:[%s302 + $0x54] sm:%s295]
                  %319 = vst [vmem:[%s303 + $0x1c] sm:%s295] %v318
                  %v320 = vld [vmem:[%s302 + $0x60] sm:%s295]
                  %321 = vst [vmem:[%s303 + $0x20] sm:%s295] %v320
                  %v322 = vld [vmem:[%s302 + $0x6c] sm:%s295]
                  %323 = vst [vmem:[%s303 + $0x24] sm:%s295] %v322
                  %v324 = vld [vmem:[%s302 + $0x78] sm:%s295]
                  %325 = vst [vmem:[%s303 + $0x28] sm:%s295] %v324
                  %v326 = vld [vmem:[%s302 + $0x84] sm:%s295]
                  %327 = vst [vmem:[%s303 + $0x2c] sm:%s295] %v326
                  %v328 = vld [vmem:[%s302 + $0x90] sm:%s295]
                  %329 = vst [vmem:[%s303 + $0x30] sm:%s295] %v328
                  %v330 = vld [vmem:[%s302 + $0x9c] sm:%s295]
                  %331 = vst [vmem:[%s303 + $0x34] sm:%s295] %v330
                  %v332 = vld [vmem:[%s302 + $0xa8] sm:%s295]
                  %333 = vst [vmem:[%s303 + $0x38] sm:%s295] %v332
                  %v334 = vld [vmem:[%s302 + $0xb4] sm:%s295]
                  %335 = vst [vmem:[%s303 + $0x3c] sm:%s295] %v334
                $region63: #{gnn_forward.3} parent=50 // loop_footer
                  %s301 = sadd.s32 1, %s297
                $region64: #{gnn_forward.3} parent=50 // loop_footer_branch
                  %296 = sbr.rel target = $region60
                $region65: #{gnn_forward.3} parent=50 // loop_exit
                  _
              $region51: #{gnn_forward.3} parent=35 // pred_fallthru
                _
            $region36: #{gnn_forward.3} parent=31 // pred_fallthru
              _
            // Predicated region
            $region37: #{gnn_forward.3} parent=31 // pred_check
              _
            $region38: #{gnn_forward.3} parent=31 // pred_check_branch
              %241 = sbr.rel (0) target = $region40
            $region39: #{gnn_forward.3} parent=31 // pred_region
              %s243 = ssub.s32 16, 1
              loop: start=0, step=1, limit=1
              $region41: #{gnn_forward.3} parent=39 // loop_pre_header
                _
              $region42: #{gnn_forward.3} parent=39 // loop_header
                %s245 = sphi 0, %s249
                %p246 = scmp.ge.s32.totalorder %s245, 1
                %s250 = sphi %s235, %s235
                %s251 = sphi %s230, %s230
              $region43: #{gnn_forward.3} parent=39 // loop_header_branch
                %248 = sbr.rel (%p246) target = $region47
              $region44: #{gnn_forward.3} parent=39 // loop_body
                %v252 = vld [vmem:[%s250] sm:%s243]
                %253 = vst [vmem:[%s251] sm:%s243] %v252
                %v254 = vld [vmem:[%s250 + $0xc] sm:%s243]
                %255 = vst [vmem:[%s251 + $0x4] sm:%s243] %v254
                %v256 = vld [vmem:[%s250 + $0x18] sm:%s243]
                %257 = vst [vmem:[%s251 + $0x8] sm:%s243] %v256
                %v258 = vld [vmem:[%s250 + $0x24] sm:%s243]
                %259 = vst [vmem:[%s251 + $0xc] sm:%s243] %v258
                %v260 = vld [vmem:[%s250 + $0x30] sm:%s243]
                %261 = vst [vmem:[%s251 + $0x10] sm:%s243] %v260
                %v262 = vld [vmem:[%s250 + $0x3c] sm:%s243]
                %263 = vst [vmem:[%s251 + $0x14] sm:%s243] %v262
                %v264 = vld [vmem:[%s250 + $0x48] sm:%s243]
                %265 = vst [vmem:[%s251 + $0x18] sm:%s243] %v264
                %v266 = vld [vmem:[%s250 + $0x54] sm:%s243]
                %267 = vst [vmem:[%s251 + $0x1c] sm:%s243] %v266
                %v268 = vld [vmem:[%s250 + $0x60] sm:%s243]
                %269 = vst [vmem:[%s251 + $0x20] sm:%s243] %v268
                %v270 = vld [vmem:[%s250 + $0x6c] sm:%s243]
                %271 = vst [vmem:[%s251 + $0x24] sm:%s243] %v270
                %v272 = vld [vmem:[%s250 + $0x78] sm:%s243]
                %273 = vst [vmem:[%s251 + $0x28] sm:%s243] %v272
                %v274 = vld [vmem:[%s250 + $0x84] sm:%s243]
                %275 = vst [vmem:[%s251 + $0x2c] sm:%s243] %v274
                %v276 = vld [vmem:[%s250 + $0x90] sm:%s243]
                %277 = vst [vmem:[%s251 + $0x30] sm:%s243] %v276
                %v278 = vld [vmem:[%s250 + $0x9c] sm:%s243]
                %279 = vst [vmem:[%s251 + $0x34] sm:%s243] %v278
                %v280 = vld [vmem:[%s250 + $0xa8] sm:%s243]
                %281 = vst [vmem:[%s251 + $0x38] sm:%s243] %v280
                %v282 = vld [vmem:[%s250 + $0xb4] sm:%s243]
                %283 = vst [vmem:[%s251 + $0x3c] sm:%s243] %v282
              $region45: #{gnn_forward.3} parent=39 // loop_footer
                %s249 = sadd.s32 1, %s245
              $region46: #{gnn_forward.3} parent=39 // loop_footer_branch
                %244 = sbr.rel target = $region42
              $region47: #{gnn_forward.3} parent=39 // loop_exit
                _
            $region40: #{gnn_forward.3} parent=31 // pred_fallthru
              _
          $region32: #{gnn_forward.3} parent=27 // pred_fallthru
            _
          %336 = vnop
        $region28: #{gnn_forward.3} parent=23 // pred_fallthru
          _
        // Predicated region
        $region66: #{gnn_forward.3} parent=23 // pred_check
          %p337 = pneg %p73
        $region67: #{gnn_forward.3} parent=23 // pred_check_branch
          %339 = sbr.rel (%p337) target = $region69
        $region68: #{gnn_forward.3} parent=23 // pred_region
          %s340 = smul.u32 16, %s21
          %p341 = scmp.lt.s32.totalorder %s340, 47
          %s342 = scalar_select %p341, %s340, 47
          %s343 = smul.addr %s342, 4
          %s344 = scalar_lea.vmem %s1, %s343
          %s345 = smul.u32 16, %s21
        $region69: #{gnn_forward.3} parent=23 // pred_fallthru
          _
        // Predicated region
        $region70: #{gnn_forward.3} parent=23 // pred_check
          %p346 = pneg %p99
        $region71: #{gnn_forward.3} parent=23 // pred_check_branch
          %348 = sbr.rel (%p346) target = $region73
        $region72: #{gnn_forward.3} parent=23 // pred_region
          %s349 = smul.u32 16, %s20
          %p350 = scmp.lt.s32.totalorder %s349, 47
          %s351 = scalar_select %p350, %s349, 47
          %s352 = smul.addr %s351, 8
          %s353 = scalar_lea.vmem %s2, %s352
          %s354 = smul.u32 16, %s20
        $region73: #{gnn_forward.3} parent=23 // pred_fallthru
          _
        // Predicated region
        $region74: #{gnn_forward.3} parent=23 // pred_check
          %p355 = pneg %p125
        $region75: #{gnn_forward.3} parent=23 // pred_check_branch
          %357 = sbr.rel (%p355) target = $region77
        $region76: #{gnn_forward.3} parent=23 // pred_region
          %s358 = smul.u32 16, %s20
          %p359 = scmp.lt.s32.totalorder %s358, 47
          %s360 = scalar_select %p359, %s358, 47
          %s361 = smul.addr %s360, 8
          %s362 = scalar_lea.vmem %s3, %s361
          %s363 = smul.u32 16, %s20
        $region77: #{gnn_forward.3} parent=23 // pred_fallthru
          _
      $region24: #{gnn_forward.3} parent=5 // pred_fallthru
        _
      %p364 = scmp.le.s32.totalorder 1, %s13
      %p365 = scmp.lt.s32.totalorder %s13, 10
      %p366 = pnand %p364, %p365
      %p367 = pneg %p366
      // Predicated region
      $region78: #{gnn_forward.3} parent=5 // pred_check
        _
      $region79: #{gnn_forward.3} parent=5 // pred_check_branch
        %369 = sbr.rel (%p366) target = $region81
      $region80: #{gnn_forward.3} parent=5 // pred_region
        %s370 = ssub.s32 %s13, 1
        %s371 = sand.u32 %s40, 1
        %s372 = sand.u32 %s40, 1
        %s373 = smul.addr %s372, 64
        %s374 = scalar_lea.vmem [#allocation4], %s373
        // Predicated region
        $region82: #{gnn_forward.3} parent=80 // pred_check
          %p375 = pneg %p53
        $region83: #{gnn_forward.3} parent=80 // pred_check_branch
          %377 = sbr.rel (%p375) target = $region85
        $region84: #{gnn_forward.3} parent=80 // pred_region
          _
        $region85: #{gnn_forward.3} parent=80 // pred_fallthru
          _
        %s378 = sand.u32 %s40, 1
        %s379 = sand.u32 %s40, 1
        %s380 = smul.addr %s379, 64
        %s381 = scalar_lea.vmem [#allocation4], %s380
        %p382 = pneg %p53
        %p383 = pneg %p50
        %s384 = smul.u32 16, %s23
        %p385 = scmp.lt.s32.totalorder %s384, 47
        %s386 = scalar_select %p385, %s384, 47
        %s387 = smul.addr %s386, 4
        %s388 = scalar_lea.vmem %s1, %s387
        %p389 = pneg %p79
        %p390 = pneg %p76
        %s391 = smul.u32 16, %s22
        %p392 = scmp.lt.s32.totalorder %s391, 47
        %s393 = scalar_select %p392, %s391, 47
        %s394 = smul.addr %s393, 8
        %s395 = scalar_lea.vmem %s2, %s394
        %p396 = pneg %p105
        %p397 = pneg %p102
        %s398 = smul.u32 16, %s22
        %p399 = scmp.lt.s32.totalorder %s398, 47
        %s400 = scalar_select %p399, %s398, 47
        %s401 = smul.addr %s400, 8
        %s402 = scalar_lea.vmem %s3, %s401
        %p403 = pneg %p131
        %p404 = pneg %p128
        %p405 = pneg %p152
        %p406 = pneg %p149
        %p407 = pneg %p173
        %p408 = pneg %p170
        %p409 = pneg %p199
        %p410 = pneg %p196
        %s411 = smul.u32 16, %s22
        %p412 = scmp.lt.s32.totalorder %s411, 47
        %s413 = scalar_select %p412, %s411, 47
        %s414 = smul.addr %s413, 8
        %s415 = scalar_lea.vmem %s6, %s414
        %s416 = smul.u32 16, %s22
        %s417 = smul.u32 16, %s23
        %p418 = scmp.lt.s32.totalorder %s417, 47
        %s419 = scalar_select %p418, %s417, 47
        %s420 = smul.addr %s419, 4
        %s421 = scalar_lea.vmem %s1, %s420
        %s422 = smul.u32 16, %s23
        %s423 = smul.u32 16, %s22
        %p424 = scmp.lt.s32.totalorder %s423, 47
        %s425 = scalar_select %p424, %s423, 47
        %s426 = smul.addr %s425, 8
        %s427 = scalar_lea.vmem %s2, %s426
        %s428 = smul.u32 16, %s22
        %s429 = smul.u32 16, %s22
        %p430 = scmp.lt.s32.totalorder %s429, 47
        %s431 = scalar_select %p430, %s429, 47
        %s432 = smul.addr %s431, 8
        %s433 = scalar_lea.vmem %s3, %s432
        %s434 = smul.u32 16, %s22
        %s435 = smul.u32 16, %s22
        %p436 = scmp.lt.s32.totalorder %s435, 47
        %s437 = scalar_select %p436, %s435, 47
        %s438 = smul.addr %s437, 8
        %s439 = scalar_lea.vmem %s6, %s438
        %s440 = smul.u32 16, %s22
        %p442 = scmp.eq.s32.totalorder %s23, 0
        // Predicated region
        $region86: #{gnn_forward.3} parent=80 // pred_check
          %p443 = pneg %p442
        $region87: #{gnn_forward.3} parent=80 // pred_check_branch
          %445 = sbr.rel (%p443) target = $region89
        $region88: #{gnn_forward.3} parent=80 // pred_region
          %446 = vst [vmem:[#allocation2] sm:$0xff] 0.0
          %447 = vst [vmem:[#allocation2 + $0x8] sm:$0xff] 0.0
          %448 = vst [vmem:[#allocation2 + $0x10] sm:$0xff] 0.0
          %449 = vst [vmem:[#allocation2 + $0x18] sm:$0xff] 0.0
          %450 = vst [vmem:[#allocation2 + $0x20] sm:$0xff] 0.0
          %451 = vst [vmem:[#allocation2 + $0x28] sm:$0xff] 0.0
          %452 = vst [vmem:[#allocation2 + $0x30] sm:$0xff] 0.0
          %453 = vst [vmem:[#allocation2 + $0x38] sm:$0xff] 0.0
          %454 = vst [vmem:[#allocation2 + $0x40] sm:$0xff] 0.0
          %455 = vst [vmem:[#allocation2 + $0x48] sm:$0xff] 0.0
          %456 = vst [vmem:[#allocation2 + $0x50] sm:$0xff] 0.0
          %457 = vst [vmem:[#allocation2 + $0x58] sm:$0xff] 0.0
          %458 = vst [vmem:[#allocation2 + $0x60] sm:$0xff] 0.0
          %459 = vst [vmem:[#allocation2 + $0x68] sm:$0xff] 0.0
          %460 = vst [vmem:[#allocation2 + $0x70] sm:$0xff] 0.0
          %461 = vst [vmem:[#allocation2 + $0x78] sm:$0xff] 0.0
        $region89: #{gnn_forward.3} parent=80 // pred_fallthru
          _
        %v462 = vld [vmem:[#allocation2] sm:$0xff]
        %v463 = vld [vmem:[#allocation2 + $0x8] sm:$0xff]
        %v464 = vld [vmem:[#allocation2 + $0x10] sm:$0xff]
        %v465 = vld [vmem:[#allocation2 + $0x18] sm:$0xff]
        %v466 = vld [vmem:[#allocation2 + $0x20] sm:$0xff]
        %v467 = vld [vmem:[#allocation2 + $0x28] sm:$0xff]
        %v468 = vld [vmem:[#allocation2 + $0x30] sm:$0xff]
        %v469 = vld [vmem:[#allocation2 + $0x38] sm:$0xff]
        %v470 = vld [vmem:[#allocation2 + $0x40] sm:$0xff]
        %v471 = vld [vmem:[#allocation2 + $0x48] sm:$0xff]
        %v472 = vld [vmem:[#allocation2 + $0x50] sm:$0xff]
        %v473 = vld [vmem:[#allocation2 + $0x58] sm:$0xff]
        %v474 = vld [vmem:[#allocation2 + $0x60] sm:$0xff]
        %v475 = vld [vmem:[#allocation2 + $0x68] sm:$0xff]
        %v476 = vld [vmem:[#allocation2 + $0x70] sm:$0xff]
        %v477 = vld [vmem:[#allocation2 + $0x78] sm:$0xff]
        %v478 = vld [vmem:[%s374] sm:$0xf]
        %v479 = vld [vmem:[%s374 + $0x4] sm:$0xf]
        %v480 = vld [vmem:[%s374 + $0x8] sm:$0xf]
        %v481 = vld [vmem:[%s374 + $0xc] sm:$0xf]
        %v482 = vld [vmem:[%s374 + $0x10] sm:$0xf]
        %v483 = vld [vmem:[%s374 + $0x14] sm:$0xf]
        %v484 = vld [vmem:[%s374 + $0x18] sm:$0xf]
        %v485 = vld [vmem:[%s374 + $0x1c] sm:$0xf]
        %v486 = vld [vmem:[%s374 + $0x20] sm:$0xf]
        %v487 = vld [vmem:[%s374 + $0x24] sm:$0xf]
        %v488 = vld [vmem:[%s374 + $0x28] sm:$0xf]
        %v489 = vld [vmem:[%s374 + $0x2c] sm:$0xf]
        %v490 = vld [vmem:[%s374 + $0x30] sm:$0xf]
        %v491 = vld [vmem:[%s374 + $0x34] sm:$0xf]
        %v492 = vld [vmem:[%s374 + $0x38] sm:$0xf]
        %v493 = vld [vmem:[%s374 + $0x3c] sm:$0xf]
        %v494 = vld [vmem:[%s421] sm:$0xf]
        %v495 = vld [vmem:[%s421 + $0x4] sm:$0xf]
        %v496 = vld [vmem:[%s421 + $0x8] sm:$0xf]
        %v497 = vld [vmem:[%s421 + $0xc] sm:$0xf]
        %v498 = vld [vmem:[%s421 + $0x10] sm:$0xf]
        %v499 = vld [vmem:[%s421 + $0x14] sm:$0xf]
        %v500 = vld [vmem:[%s421 + $0x18] sm:$0xf]
        %v501 = vld [vmem:[%s421 + $0x1c] sm:$0xf]
        %v502 = vld [vmem:[%s421 + $0x20] sm:$0xf]
        %v503 = vld [vmem:[%s421 + $0x24] sm:$0xf]
        %v504 = vld [vmem:[%s421 + $0x28] sm:$0xf]
        %v505 = vld [vmem:[%s421 + $0x2c] sm:$0xf]
        %v506 = vld [vmem:[%s421 + $0x30] sm:$0xf]
        %v507 = vld [vmem:[%s421 + $0x34] sm:$0xf]
        %v508 = vld [vmem:[%s421 + $0x38] sm:$0xf]
        %v509 = vld [vmem:[%s421 + $0x3c] sm:$0xf]
        %v526 = vunpack.c.l.b16 %v478
        %v527 = vunpack.c.l.b16 %v479
        %v528 = vunpack.c.l.b16 %v480
        %v529 = vunpack.c.l.b16 %v481
        %v530 = vunpack.c.l.b16 %v482
        %v531 = vunpack.c.l.b16 %v483
        %v532 = vunpack.c.l.b16 %v484
        %v533 = vunpack.c.l.b16 %v485
        %v534 = vunpack.c.l.b16 %v486
        %v535 = vunpack.c.l.b16 %v487
        %v536 = vunpack.c.l.b16 %v488
        %v537 = vunpack.c.l.b16 %v489
        %v538 = vunpack.c.l.b16 %v490
        %v539 = vunpack.c.l.b16 %v491
        %v540 = vunpack.c.l.b16 %v492
        %v541 = vunpack.c.l.b16 %v493
        %v542 = vpack.c.b16 %v527, %v526
        %v543 = vpack.c.b16 %v529, %v528
        %v544 = vpack.c.b16 %v531, %v530
        %v545 = vpack.c.b16 %v533, %v532
        %v546 = vpack.c.b16 %v535, %v534
        %v547 = vpack.c.b16 %v537, %v536
        %v548 = vpack.c.b16 %v539, %v538
        %v549 = vpack.c.b16 %v541, %v540
        %v574 = vunpack.c.l.b16 %v494
        %v575 = vunpack.c.l.b16 %v495
        %v576 = vunpack.c.l.b16 %v496
        %v577 = vunpack.c.l.b16 %v497
        %v578 = vunpack.c.l.b16 %v498
        %v579 = vunpack.c.l.b16 %v499
        %v580 = vunpack.c.l.b16 %v500
        %v581 = vunpack.c.l.b16 %v501
        %v582 = vunpack.c.l.b16 %v502
        %v583 = vunpack.c.l.b16 %v503
        %v584 = vunpack.c.l.b16 %v504
        %v585 = vunpack.c.l.b16 %v505
        %v586 = vunpack.c.l.b16 %v506
        %v587 = vunpack.c.l.b16 %v507
        %v588 = vunpack.c.l.b16 %v508
        %v589 = vunpack.c.l.b16 %v509
        %v590 = vpack.c.b16 %v575, %v574
        %v591 = vpack.c.b16 %v577, %v576
        %v592 = vpack.c.b16 %v579, %v578
        %v593 = vpack.c.b16 %v581, %v580
        %v594 = vpack.c.b16 %v583, %v582
        %v595 = vpack.c.b16 %v585, %v584
        %v596 = vpack.c.b16 %v587, %v586
        %v597 = vpack.c.b16 %v589, %v588
        %606 = vmatprep.subr.bf16.mxu0 0
        %607 = vmatpush1.bf16.msra.mxu0 %v597
        %608 = vmatprep.subr.bf16.mxu0 0
        %609 = vmatpush1.bf16.msra.mxu0 %v596
        %610 = vmatprep.subr.bf16.mxu0 0
        %611 = vmatpush1.bf16.msra.mxu0 %v595
        %612 = vmatprep.subr.bf16.mxu0 0
        %613 = vmatpush1.bf16.msra.mxu0 %v594
        %614 = vmatprep.subr.bf16.mxu0 0
        %615 = vmatpush1.bf16.msra.mxu0 %v593
        %616 = vmatprep.subr.bf16.mxu0 0
        %617 = vmatpush1.bf16.msra.mxu0 %v592
        %618 = vmatprep.subr.bf16.mxu0 0
        %619 = vmatpush1.bf16.msra.mxu0 %v591
        %620 = vmatprep.subr.bf16.mxu0 0
        %621 = vmatpush1.bf16.msra.mxu0 %v590
        %622 = vmatprep.subr.bf16.mxu0 0
        %623 = vmatpush2.bf16.msra.mxu0 0
        %624 = vmatprep.subr.bf16.mxu0 0
        %625 = vmatpush2.bf16.msra.mxu0 0
        %626 = vmatprep.subr.bf16.mxu0 0
        %627 = vmatpush2.bf16.msra.mxu0 0
        %628 = vmatprep.subr.bf16.mxu0 0
        %629 = vmatpush2.bf16.msra.mxu0 0
        %630 = vmatprep.subr.bf16.mxu0 0
        %631 = vmatpush2.bf16.msra.mxu0 0
        %632 = vmatprep.subr.bf16.mxu0 0
        %633 = vmatpush2.bf16.msra.mxu0 0
        %634 = vmatprep.subr.bf16.mxu0 0
        %635 = vmatpush2.bf16.msra.mxu0 0
        %636 = vmatprep.subr.bf16.mxu0 0
        %637 = vmatpush2.bf16.msra.mxu0 0
        %638 = vmatprep.mubr.bf16.mxu0 0
        %639 = vmatmul.mubr.bf16.gmra.mxu0 %v542
        %v640 = vpop.f32.mrf.mxu0
        %v641 = vadd.f32 0.0, %v640
        %v642 = vpop.f32.mrf.mxu0
        %v643 = vpop.f32.mrf.mxu0
        %v644 = vadd.f32 0.0, %v643
        %v645 = vpop.f32.mrf.mxu0
        %646 = vmatprep.mubr.bf16.mxu0 0
        %647 = vmatmul.mubr.bf16.gmra.mxu0 %v543
        %v648 = vpop.f32.mrf.mxu0
        %v649 = vadd.f32 0.0, %v648
        %v650 = vpop.f32.mrf.mxu0
        %v651 = vpop.f32.mrf.mxu0
        %v652 = vadd.f32 0.0, %v651
        %v653 = vpop.f32.mrf.mxu0
        %654 = vmatprep.mubr.bf16.mxu0 0
        %655 = vmatmul.mubr.bf16.gmra.mxu0 %v544
        %v656 = vpop.f32.mrf.mxu0
        %v657 = vadd.f32 0.0, %v656
        %v658 = vpop.f32.mrf.mxu0
        %v659 = vpop.f32.mrf.mxu0
        %v660 = vadd.f32 0.0, %v659
        %v661 = vpop.f32.mrf.mxu0
        %662 = vmatprep.mubr.bf16.mxu0 0
        %663 = vmatmul.mubr.bf16.gmra.mxu0 %v545
        %v664 = vpop.f32.mrf.mxu0
        %v665 = vadd.f32 0.0, %v664
        %v666 = vpop.f32.mrf.mxu0
        %v667 = vpop.f32.mrf.mxu0
        %v668 = vadd.f32 0.0, %v667
        %v669 = vpop.f32.mrf.mxu0
        %670 = vmatprep.mubr.bf16.mxu0 0
        %671 = vmatmul.mubr.bf16.gmra.mxu0 %v546
        %v672 = vpop.f32.mrf.mxu0
        %v673 = vadd.f32 0.0, %v672
        %v674 = vpop.f32.mrf.mxu0
        %v675 = vpop.f32.mrf.mxu0
        %v676 = vadd.f32 0.0, %v675
        %v677 = vpop.f32.mrf.mxu0
        %678 = vmatprep.mubr.bf16.mxu0 0
        %679 = vmatmul.mubr.bf16.gmra.mxu0 %v547
        %v680 = vpop.f32.mrf.mxu0
        %v681 = vadd.f32 0.0, %v680
        %v682 = vpop.f32.mrf.mxu0
        %v683 = vpop.f32.mrf.mxu0
        %v684 = vadd.f32 0.0, %v683
        %v685 = vpop.f32.mrf.mxu0
        %686 = vmatprep.mubr.bf16.mxu0 0
        %687 = vmatmul.mubr.bf16.gmra.mxu0 %v548
        %v688 = vpop.f32.mrf.mxu0
        %v689 = vadd.f32 0.0, %v688
        %v690 = vpop.f32.mrf.mxu0
        %v691 = vpop.f32.mrf.mxu0
        %v692 = vadd.f32 0.0, %v691
        %v693 = vpop.f32.mrf.mxu0
        %694 = vmatprep.mubr.bf16.mxu0 0
        %695 = vmatmul.mubr.bf16.gmra.mxu0 %v549
        %v696 = vpop.f32.mrf.mxu0
        %v697 = vadd.f32 0.0, %v696
        %v698 = vpop.f32.mrf.mxu0
        %v699 = vpop.f32.mrf.mxu0
        %v700 = vadd.f32 0.0, %v699
        %v701 = vpop.f32.mrf.mxu0
        %702 = vdwg.mxu0
        %v703 = vadd.f32 %v462, %v641
        %v704 = vadd.f32 %v463, %v644
        %v705 = vadd.f32 %v464, %v649
        %v706 = vadd.f32 %v465, %v652
        %v707 = vadd.f32 %v466, %v657
        %v708 = vadd.f32 %v467, %v660
        %v709 = vadd.f32 %v468, %v665
        %v710 = vadd.f32 %v469, %v668
        %v711 = vadd.f32 %v470, %v673
        %v712 = vadd.f32 %v471, %v676
        %v713 = vadd.f32 %v472, %v681
        %v714 = vadd.f32 %v473, %v684
        %v715 = vadd.f32 %v474, %v689
        %v716 = vadd.f32 %v475, %v692
        %v717 = vadd.f32 %v476, %v697
        %v718 = vadd.f32 %v477, %v700
        %719 = vst [vmem:[#allocation2] sm:$0xff] %v703
        %720 = vst [vmem:[#allocation2 + $0x8] sm:$0xff] %v704
        %721 = vst [vmem:[#allocation2 + $0x10] sm:$0xff] %v705
        %722 = vst [vmem:[#allocation2 + $0x18] sm:$0xff] %v706
        %723 = vst [vmem:[#allocation2 + $0x20] sm:$0xff] %v707
        %724 = vst [vmem:[#allocation2 + $0x28] sm:$0xff] %v708
        %725 = vst [vmem:[#allocation2 + $0x30] sm:$0xff] %v709
        %726 = vst [vmem:[#allocation2 + $0x38] sm:$0xff] %v710
        %727 = vst [vmem:[#allocation2 + $0x40] sm:$0xff] %v711
        %728 = vst [vmem:[#allocation2 + $0x48] sm:$0xff] %v712
        %729 = vst [vmem:[#allocation2 + $0x50] sm:$0xff] %v713
        %730 = vst [vmem:[#allocation2 + $0x58] sm:$0xff] %v714
        %731 = vst [vmem:[#allocation2 + $0x60] sm:$0xff] %v715
        %732 = vst [vmem:[#allocation2 + $0x68] sm:$0xff] %v716
        %733 = vst [vmem:[#allocation2 + $0x70] sm:$0xff] %v717
        %734 = vst [vmem:[#allocation2 + $0x78] sm:$0xff] %v718
        %p735 = scmp.eq.s32.totalorder %s23, 2
        // Predicated region
        $region90: #{gnn_forward.3} parent=80 // pred_check
          %p736 = pneg %p735
        $region91: #{gnn_forward.3} parent=80 // pred_check_branch
          %738 = sbr.rel (%p736) target = $region93
        $region92: #{gnn_forward.3} parent=80 // pred_region
          %v739 = vld [vmem:[#allocation2] sm:$0xff]
          %v740 = vld [vmem:[#allocation2 + $0x8] sm:$0xff]
          %v741 = vld [vmem:[#allocation2 + $0x10] sm:$0xff]
          %v742 = vld [vmem:[#allocation2 + $0x18] sm:$0xff]
          %v743 = vld [vmem:[#allocation2 + $0x20] sm:$0xff]
          %v744 = vld [vmem:[#allocation2 + $0x28] sm:$0xff]
          %v745 = vld [vmem:[#allocation2 + $0x30] sm:$0xff]
          %v746 = vld [vmem:[#allocation2 + $0x38] sm:$0xff]
          %v747 = vld [vmem:[#allocation2 + $0x40] sm:$0xff]
          %v748 = vld [vmem:[#allocation2 + $0x48] sm:$0xff]
          %v749 = vld [vmem:[#allocation2 + $0x50] sm:$0xff]
          %v750 = vld [vmem:[#allocation2 + $0x58] sm:$0xff]
          %v751 = vld [vmem:[#allocation2 + $0x60] sm:$0xff]
          %v752 = vld [vmem:[#allocation2 + $0x68] sm:$0xff]
          %v753 = vld [vmem:[#allocation2 + $0x70] sm:$0xff]
          %v754 = vld [vmem:[#allocation2 + $0x78] sm:$0xff]
          %s755 = sld [smem:[#allocation3]]
          %s756 = ssub.f32 %s755, 1.0
          %v757 = vld [vmem:[%s433] sm:$0xff]
          %v758 = vld [vmem:[%s433 + $0x8] sm:$0xff]
          %v759 = vld [vmem:[%s433 + $0x10] sm:$0xff]
          %v760 = vld [vmem:[%s433 + $0x18] sm:$0xff]
          %v761 = vld [vmem:[%s433 + $0x20] sm:$0xff]
          %v762 = vld [vmem:[%s433 + $0x28] sm:$0xff]
          %v763 = vld [vmem:[%s433 + $0x30] sm:$0xff]
          %v764 = vld [vmem:[%s433 + $0x38] sm:$0xff]
          %v765 = vld [vmem:[%s433 + $0x40] sm:$0xff]
          %v766 = vld [vmem:[%s433 + $0x48] sm:$0xff]
          %v767 = vld [vmem:[%s433 + $0x50] sm:$0xff]
          %v768 = vld [vmem:[%s433 + $0x58] sm:$0xff]
          %v769 = vld [vmem:[%s433 + $0x60] sm:$0xff]
          %v770 = vld [vmem:[%s433 + $0x68] sm:$0xff]
          %v771 = vld [vmem:[%s433 + $0x70] sm:$0xff]
          %v772 = vld [vmem:[%s433 + $0x78] sm:$0xff]
          %v773 = vstv %s756
          %v774 = vmul.f32 %v773, %v757
          %v775 = vmul.f32 %v773, %v758
          %v776 = vmul.f32 %v773, %v759
          %v777 = vmul.f32 %v773, %v760
          %v778 = vmul.f32 %v773, %v761
          %v779 = vmul.f32 %v773, %v762
          %v780 = vmul.f32 %v773, %v763
          %v781 = vmul.f32 %v773, %v764
          %v782 = vmul.f32 %v773, %v765
          %v783 = vmul.f32 %v773, %v766
          %v784 = vmul.f32 %v773, %v767
          %v785 = vmul.f32 %v773, %v768
          %v786 = vmul.f32 %v773, %v769
          %v787 = vmul.f32 %v773, %v770
          %v788 = vmul.f32 %v773, %v771
          %v789 = vmul.f32 %v773, %v772
          %v790 = vld [vmem:[%s427] sm:$0xff]
          %v791 = vld [vmem:[%s427 + $0x8] sm:$0xff]
          %v792 = vld [vmem:[%s427 + $0x10] sm:$0xff]
          %v793 = vld [vmem:[%s427 + $0x18] sm:$0xff]
          %v794 = vld [vmem:[%s427 + $0x20] sm:$0xff]
          %v795 = vld [vmem:[%s427 + $0x28] sm:$0xff]
          %v796 = vld [vmem:[%s427 + $0x30] sm:$0xff]
          %v797 = vld [vmem:[%s427 + $0x38] sm:$0xff]
          %v798 = vld [vmem:[%s427 + $0x40] sm:$0xff]
          %v799 = vld [vmem:[%s427 + $0x48] sm:$0xff]
          %v800 = vld [vmem:[%s427 + $0x50] sm:$0xff]
          %v801 = vld [vmem:[%s427 + $0x58] sm:$0xff]
          %v802 = vld [vmem:[%s427 + $0x60] sm:$0xff]
          %v803 = vld [vmem:[%s427 + $0x68] sm:$0xff]
          %v804 = vld [vmem:[%s427 + $0x70] sm:$0xff]
          %v805 = vld [vmem:[%s427 + $0x78] sm:$0xff]
          %807 = vset.pattern.permute.xlu0 0
          %808 = vperm.xlu0 %807, %v774
          %v809 = vpop.permute.xlu0 %808
          %812 = vset.pattern.permute.xlu0 0
          %813 = vperm.xlu0 %812, %v775
          %v814 = vpop.permute.xlu0 %813
          %817 = vset.pattern.permute.xlu0 0
          %818 = vperm.xlu0 %817, %v776
          %v819 = vpop.permute.xlu0 %818
          %822 = vset.pattern.permute.xlu0 0
          %823 = vperm.xlu0 %822, %v777
          %v824 = vpop.permute.xlu0 %823
          %827 = vset.pattern.permute.xlu0 0
          %828 = vperm.xlu0 %827, %v778
          %v829 = vpop.permute.xlu0 %828
          %832 = vset.pattern.permute.xlu0 0
          %833 = vperm.xlu0 %832, %v779
          %v834 = vpop.permute.xlu0 %833
          %837 = vset.pattern.permute.xlu0 0
          %838 = vperm.xlu0 %837, %v780
          %v839 = vpop.permute.xlu0 %838
          %842 = vset.pattern.permute.xlu0 0
          %843 = vperm.xlu0 %842, %v781
          %v844 = vpop.permute.xlu0 %843
          %847 = vset.pattern.permute.xlu0 0
          %848 = vperm.xlu0 %847, %v782
          %v849 = vpop.permute.xlu0 %848
          %852 = vset.pattern.permute.xlu0 0
          %853 = vperm.xlu0 %852, %v783
          %v854 = vpop.permute.xlu0 %853
          %857 = vset.pattern.permute.xlu0 0
          %858 = vperm.xlu0 %857, %v784
          %v859 = vpop.permute.xlu0 %858
          %862 = vset.pattern.permute.xlu0 0
          %863 = vperm.xlu0 %862, %v785
          %v864 = vpop.permute.xlu0 %863
          %867 = vset.pattern.permute.xlu0 0
          %868 = vperm.xlu0 %867, %v786
          %v869 = vpop.permute.xlu0 %868
          %872 = vset.pattern.permute.xlu0 0
          %873 = vperm.xlu0 %872, %v787
          %v874 = vpop.permute.xlu0 %873
          %877 = vset.pattern.permute.xlu0 0
          %878 = vperm.xlu0 %877, %v788
          %v879 = vpop.permute.xlu0 %878
          %882 = vset.pattern.permute.xlu0 0
          %883 = vperm.xlu0 %882, %v789
          %v884 = vpop.permute.xlu0 %883
          %v886 = vmul.f32 %v809, %v790
          %v887 = vmul.f32 %v814, %v791
          %v888 = vmul.f32 %v819, %v792
          %v889 = vmul.f32 %v824, %v793
          %v890 = vmul.f32 %v829, %v794
          %v891 = vmul.f32 %v834, %v795
          %v892 = vmul.f32 %v839, %v796
          %v893 = vmul.f32 %v844, %v797
          %v894 = vmul.f32 %v849, %v798
          %v895 = vmul.f32 %v854, %v799
          %v896 = vmul.f32 %v859, %v800
          %v897 = vmul.f32 %v864, %v801
          %v898 = vmul.f32 %v869, %v802
          %v899 = vmul.f32 %v874, %v803
          %v900 = vmul.f32 %v879, %v804
          %v901 = vmul.f32 %v884, %v805
          %v902 = vadd.f32 %v739, %v886
          %v903 = vadd.f32 %v740, %v887
          %v904 = vadd.f32 %v741, %v888
          %v905 = vadd.f32 %v742, %v889
          %v906 = vadd.f32 %v743, %v890
          %v907 = vadd.f32 %v744, %v891
          %v908 = vadd.f32 %v745, %v892
          %v909 = vadd.f32 %v746, %v893
          %v910 = vadd.f32 %v747, %v894
          %v911 = vadd.f32 %v748, %v895
          %v912 = vadd.f32 %v749, %v896
          %v913 = vadd.f32 %v750, %v897
          %v914 = vadd.f32 %v751, %v898
          %v915 = vadd.f32 %v752, %v899
          %v916 = vadd.f32 %v753, %v900
          %v917 = vadd.f32 %v754, %v901
          %v918 = vld [vmem:[%s4] sm:$0x1]
          %v920 = vlaneseq
          %v921 = vshrl.u32 %v920, 7
          %v922 = vsub.s32 0, %v921
          %v923 = vrot.slane %v918, %v922
          %v925 = vadd.f32 %v902, %v923
          %v926 = vadd.f32 %v903, %v923
          %v927 = vadd.f32 %v904, %v923
          %v928 = vadd.f32 %v905, %v923
          %v929 = vadd.f32 %v906, %v923
          %v930 = vadd.f32 %v907, %v923
          %v931 = vadd.f32 %v908, %v923
          %v932 = vadd.f32 %v909, %v923
          %v933 = vadd.f32 %v910, %v923
          %v934 = vadd.f32 %v911, %v923
          %v935 = vadd.f32 %v912, %v923
          %v936 = vadd.f32 %v913, %v923
          %v937 = vadd.f32 %v914, %v923
          %v938 = vadd.f32 %v915, %v923
          %v939 = vadd.f32 %v916, %v923
          %v940 = vadd.f32 %v917, %v923
          %v941 = vlaneseq
          %v942 = vand.u32 %v941, 127
          %vm943 = vcmp.lt.s32.totalorder %v942, 8
          %v944 = vsel %vm943, %v925, -1e+30
          %v945 = vsel %vm943, %v926, -1e+30
          %v946 = vsel %vm943, %v927, -1e+30
          %v947 = vsel %vm943, %v928, -1e+30
          %v948 = vsel %vm943, %v929, -1e+30
          %v949 = vsel %vm943, %v930, -1e+30
          %v950 = vsel %vm943, %v931, -1e+30
          %v951 = vsel %vm943, %v932, -1e+30
          %v952 = vsel %vm943, %v933, -1e+30
          %v953 = vsel %vm943, %v934, -1e+30
          %v954 = vsel %vm943, %v935, -1e+30
          %v955 = vsel %vm943, %v936, -1e+30
          %v956 = vsel %vm943, %v937, -1e+30
          %v957 = vsel %vm943, %v938, -1e+30
          %v958 = vsel %vm943, %v939, -1e+30
          %v959 = vsel %vm943, %v940, -1e+30
          %960 = vmax.xlane.f32.xlu0 %v944
          %v961 = vpop.xlane.xlu0 %960
          %962 = vmax.xlane.f32.xlu0 %v945
          %v963 = vpop.xlane.xlu0 %962
          %964 = vmax.xlane.f32.xlu0 %v946
          %v965 = vpop.xlane.xlu0 %964
          %966 = vmax.xlane.f32.xlu0 %v947
          %v967 = vpop.xlane.xlu0 %966
          %968 = vmax.xlane.f32.xlu0 %v948
          %v969 = vpop.xlane.xlu0 %968
          %970 = vmax.xlane.f32.xlu0 %v949
          %v971 = vpop.xlane.xlu0 %970
          %972 = vmax.xlane.f32.xlu0 %v950
          %v973 = vpop.xlane.xlu0 %972
          %974 = vmax.xlane.f32.xlu0 %v951
          %v975 = vpop.xlane.xlu0 %974
          %976 = vmax.xlane.f32.xlu0 %v952
          %v977 = vpop.xlane.xlu0 %976
          %978 = vmax.xlane.f32.xlu0 %v953
          %v979 = vpop.xlane.xlu0 %978
          %980 = vmax.xlane.f32.xlu0 %v954
          %v981 = vpop.xlane.xlu0 %980
          %982 = vmax.xlane.f32.xlu0 %v955
          %v983 = vpop.xlane.xlu0 %982
          %984 = vmax.xlane.f32.xlu0 %v956
          %v985 = vpop.xlane.xlu0 %984
          %986 = vmax.xlane.f32.xlu0 %v957
          %v987 = vpop.xlane.xlu0 %986
          %988 = vmax.xlane.f32.xlu0 %v958
          %v989 = vpop.xlane.xlu0 %988
          %990 = vmax.xlane.f32.xlu0 %v959
          %v991 = vpop.xlane.xlu0 %990
          %v992 = vsub.f32 %v944, %v961
          %v993 = vsub.f32 %v945, %v963
          %v994 = vsub.f32 %v946, %v965
          %v995 = vsub.f32 %v947, %v967
          %v996 = vsub.f32 %v948, %v969
          %v997 = vsub.f32 %v949, %v971
          %v998 = vsub.f32 %v950, %v973
          %v999 = vsub.f32 %v951, %v975
          %v1000 = vsub.f32 %v952, %v977
          %v1001 = vsub.f32 %v953, %v979
          %v1002 = vsub.f32 %v954, %v981
          %v1003 = vsub.f32 %v955, %v983
          %v1004 = vsub.f32 %v956, %v985
          %v1005 = vsub.f32 %v957, %v987
          %v1006 = vsub.f32 %v958, %v989
          %v1007 = vsub.f32 %v959, %v991
          %v1008 = vmul.f32 %v992, 1.442695
          %v1009 = vpow.pop %v1008
          %v1010 = vmul.f32 %v993, 1.442695
          %v1011 = vpow.pop %v1010
          %v1012 = vmul.f32 %v994, 1.442695
          %v1013 = vpow.pop %v1012
          %v1014 = vmul.f32 %v995, 1.442695
          %v1015 = vpow.pop %v1014
          %v1016 = vmul.f32 %v996, 1.442695
          %v1017 = vpow.pop %v1016
          %v1018 = vmul.f32 %v997, 1.442695
          %v1019 = vpow.pop %v1018
          %v1020 = vmul.f32 %v998, 1.442695
          %v1021 = vpow.pop %v1020
          %v1022 = vmul.f32 %v999, 1.442695
          %v1023 = vpow.pop %v1022
          %v1024 = vmul.f32 %v1000, 1.442695
          %v1025 = vpow.pop %v1024
          %v1026 = vmul.f32 %v1001, 1.442695
          %v1027 = vpow.pop %v1026
          %v1028 = vmul.f32 %v1002, 1.442695
          %v1029 = vpow.pop %v1028
          %v1030 = vmul.f32 %v1003, 1.442695
          %v1031 = vpow.pop %v1030
          %v1032 = vmul.f32 %v1004, 1.442695
          %v1033 = vpow.pop %v1032
          %v1034 = vmul.f32 %v1005, 1.442695
          %v1035 = vpow.pop %v1034
          %v1036 = vmul.f32 %v1006, 1.442695
          %v1037 = vpow.pop %v1036
          %v1038 = vmul.f32 %v1007, 1.442695
          %v1039 = vpow.pop %v1038
          %1040 = vadd.xlane.f32.xlu0 %v1009
          %v1041 = vpop.xlane.xlu0 %1040
          %1042 = vadd.xlane.f32.xlu0 %v1011
          %v1043 = vpop.xlane.xlu0 %1042
          %1044 = vadd.xlane.f32.xlu0 %v1013
          %v1045 = vpop.xlane.xlu0 %1044
          %1046 = vadd.xlane.f32.xlu0 %v1015
          %v1047 = vpop.xlane.xlu0 %1046
          %1048 = vadd.xlane.f32.xlu0 %v1017
          %v1049 = vpop.xlane.xlu0 %1048
          %1050 = vadd.xlane.f32.xlu0 %v1019
          %v1051 = vpop.xlane.xlu0 %1050
          %1052 = vadd.xlane.f32.xlu0 %v1021
          %v1053 = vpop.xlane.xlu0 %1052
          %1054 = vadd.xlane.f32.xlu0 %v1023
          %v1055 = vpop.xlane.xlu0 %1054
          %1056 = vadd.xlane.f32.xlu0 %v1025
          %v1057 = vpop.xlane.xlu0 %1056
          %1058 = vadd.xlane.f32.xlu0 %v1027
          %v1059 = vpop.xlane.xlu0 %1058
          %1060 = vadd.xlane.f32.xlu0 %v1029
          %v1061 = vpop.xlane.xlu0 %1060
          %1062 = vadd.xlane.f32.xlu0 %v1031
          %v1063 = vpop.xlane.xlu0 %1062
          %1064 = vadd.xlane.f32.xlu0 %v1033
          %v1065 = vpop.xlane.xlu0 %1064
          %1066 = vadd.xlane.f32.xlu0 %v1035
          %v1067 = vpop.xlane.xlu0 %1066
          %1068 = vadd.xlane.f32.xlu0 %v1037
          %v1069 = vpop.xlane.xlu0 %1068
          %1070 = vadd.xlane.f32.xlu0 %v1039
          %v1071 = vpop.xlane.xlu0 %1070
          %v1072 = vlog2.pop %v1041
          %v1073 = vmul.f32 %v1072, 0.6931472
          %v1074 = vlog2.pop %v1043
          %v1075 = vmul.f32 %v1074, 0.6931472
          %v1076 = vlog2.pop %v1045
          %v1077 = vmul.f32 %v1076, 0.6931472
          %v1078 = vlog2.pop %v1047
          %v1079 = vmul.f32 %v1078, 0.6931472
          %v1080 = vlog2.pop %v1049
          %v1081 = vmul.f32 %v1080, 0.6931472
          %v1082 = vlog2.pop %v1051
          %v1083 = vmul.f32 %v1082, 0.6931472
          %v1084 = vlog2.pop %v1053
          %v1085 = vmul.f32 %v1084, 0.6931472
          %v1086 = vlog2.pop %v1055
          %v1087 = vmul.f32 %v1086, 0.6931472
          %v1088 = vlog2.pop %v1057
          %v1089 = vmul.f32 %v1088, 0.6931472
          %v1090 = vlog2.pop %v1059
          %v1091 = vmul.f32 %v1090, 0.6931472
          %v1092 = vlog2.pop %v1061
          %v1093 = vmul.f32 %v1092, 0.6931472
          %v1094 = vlog2.pop %v1063
          %v1095 = vmul.f32 %v1094, 0.6931472
          %v1096 = vlog2.pop %v1065
          %v1097 = vmul.f32 %v1096, 0.6931472
          %v1098 = vlog2.pop %v1067
          %v1099 = vmul.f32 %v1098, 0.6931472
          %v1100 = vlog2.pop %v1069
          %v1101 = vmul.f32 %v1100, 0.6931472
          %v1102 = vlog2.pop %v1071
          %v1103 = vmul.f32 %v1102, 0.6931472
          %v1104 = vsub.f32 %v992, %v1073
          %v1105 = vsub.f32 %v993, %v1075
          %v1106 = vsub.f32 %v994, %v1077
          %v1107 = vsub.f32 %v995, %v1079
          %v1108 = vsub.f32 %v996, %v1081
          %v1109 = vsub.f32 %v997, %v1083
          %v1110 = vsub.f32 %v998, %v1085
          %v1111 = vsub.f32 %v999, %v1087
          %v1112 = vsub.f32 %v1000, %v1089
          %v1113 = vsub.f32 %v1001, %v1091
          %v1114 = vsub.f32 %v1002, %v1093
          %v1115 = vsub.f32 %v1003, %v1095
          %v1116 = vsub.f32 %v1004, %v1097
          %v1117 = vsub.f32 %v1005, %v1099
          %v1118 = vsub.f32 %v1006, %v1101
          %v1119 = vsub.f32 %v1007, %v1103
          %1120 = vst [vmem:[%s439] sm:$0xff] %v1104
          %1121 = vst [vmem:[%s439 + $0x8] sm:$0xff] %v1105
          %1122 = vst [vmem:[%s439 + $0x10] sm:$0xff] %v1106
          %1123 = vst [vmem:[%s439 + $0x18] sm:$0xff] %v1107
          %1124 = vst [vmem:[%s439 + $0x20] sm:$0xff] %v1108
          %1125 = vst [vmem:[%s439 + $0x28] sm:$0xff] %v1109
          %1126 = vst [vmem:[%s439 + $0x30] sm:$0xff] %v1110
          %1127 = vst [vmem:[%s439 + $0x38] sm:$0xff] %v1111
          %1128 = vst [vmem:[%s439 + $0x40] sm:$0xff] %v1112
          %1129 = vst [vmem:[%s439 + $0x48] sm:$0xff] %v1113
          %1130 = vst [vmem:[%s439 + $0x50] sm:$0xff] %v1114
          %1131 = vst [vmem:[%s439 + $0x58] sm:$0xff] %v1115
          %1132 = vst [vmem:[%s439 + $0x60] sm:$0xff] %v1116
          %1133 = vst [vmem:[%s439 + $0x68] sm:$0xff] %v1117
          %1134 = vst [vmem:[%s439 + $0x70] sm:$0xff] %v1118
          %1135 = vst [vmem:[%s439 + $0x78] sm:$0xff] %v1119
        $region93: #{gnn_forward.3} parent=80 // pred_fallthru
          _
        %s1136 = smul.u32 16, %s22
        %p1137 = scmp.lt.s32.totalorder %s1136, 47
        %s1138 = scalar_select %p1137, %s1136, 47
        %s1139 = smul.addr %s1138, 8
        %s1140 = scalar_lea.vmem %s6, %s1139
        // Predicated region
        $region94: #{gnn_forward.3} parent=80 // pred_check
          %p1141 = pneg %p196
        $region95: #{gnn_forward.3} parent=80 // pred_check_branch
          %1143 = sbr.rel (%p1141) target = $region97
        $region96: #{gnn_forward.3} parent=80 // pred_region
          %s1144 = smul.u32 16, %s22
        $region97: #{gnn_forward.3} parent=80 // pred_fallthru
          _
      $region81: #{gnn_forward.3} parent=5 // pred_fallthru
        _
      %p1145 = scmp.le.s32.totalorder 2, %s13
      // Predicated region
      $region98: #{gnn_forward.3} parent=5 // pred_check
        %p1146 = pneg %p1145
      $region99: #{gnn_forward.3} parent=5 // pred_check_branch
        %1148 = sbr.rel (%p1146) target = $region101
      $region100: #{gnn_forward.3} parent=5 // pred_region
        %s1149 = ssub.s32 %s13, 2
        // Predicated region
        $region102: #{gnn_forward.3} parent=100 // pred_check
          %p1150 = pneg %p202
        $region103: #{gnn_forward.3} parent=100 // pred_check_branch
          %1152 = sbr.rel (%p1150) target = $region105
        $region104: #{gnn_forward.3} parent=100 // pred_region
          %s1153 = smul.u32 16, %s24
          %p1154 = scmp.lt.s32.totalorder %s1153, 47
          %s1155 = scalar_select %p1154, %s1153, 47
          %s1156 = smul.addr %s1155, 8
          %s1157 = scalar_lea.vmem %s6, %s1156
        $region105: #{gnn_forward.3} parent=100 // pred_fallthru
          _
      $region101: #{gnn_forward.3} parent=5 // pred_fallthru
        _
    $region6: #{gnn_forward.3} parent=1 // loop_footer
      %s17 = sadd.s32 1, %s13
    $region7: #{gnn_forward.3} parent=1 // loop_footer_branch
      %12 = sbr.rel target = $region3
    $region8: #{gnn_forward.3} parent=1 // loop_exit
      _

</llo_original>
